<compile_context>
chip_gen: v6e
topology: v6e:2x2x1
jax: 0.10.0
libtpu: 0.0.40
codegen_flags: <defaults>
</compile_context>

<pallas_src>
import functools
import math

import jax
import jax.numpy as jnp
from jax import lax
from jax.experimental import pallas as pl
from jax.experimental.pallas import tpu as pltpu

_NEG_LARGE = -1e30  # finite stand-in for -inf (no NaN on fully-masked rows)


def _mmha_kernel(x_ref, mask_ref,
                 wq_ref, bq_ref, wk_ref, bk_ref, wv_ref, bv_ref,
                 gamma_ref, beta_ref,
                 o_ref,
                 k_scr, v_scr, acc_scr,
                 *, num_heads, head_dim, ln_eps):
    S = x_ref.shape[1]
    Tq = o_ref.shape[1]
    qi = pl.program_id(1)
    q_start = pl.multiple_of(qi * Tq, Tq)
    inv_sqrt_d = 1.0 / math.sqrt(head_dim)

    # ---- K / V for the whole sequence: computed once per batch (qi == 0) and
    #      kept resident in bf16 VMEM scratch across all query tiles. ----
    @pl.when(qi == 0)
    def _():
        xb = x_ref[0].astype(jnp.bfloat16)                                  # [S, E]
        k = jnp.dot(xb, wk_ref[...], preferred_element_type=jnp.float32) + bk_ref[...]
        v = jnp.dot(xb, wv_ref[...], preferred_element_type=jnp.float32) + bv_ref[...]
        k_scr[...] = k.astype(jnp.bfloat16)
        v_scr[...] = v.astype(jnp.bfloat16)

    # ---- Q projection for this query tile (1/sqrt(d) folded into q). ----
    xq = x_ref[0, pl.ds(q_start, Tq), :]                                    # [Tq, E] f32
    q = jnp.dot(xq.astype(jnp.bfloat16), wq_ref[...],
                preferred_element_type=jnp.float32) + bq_ref[...]
    q_b = (q * inv_sqrt_d).astype(jnp.bfloat16)                             # [Tq, E]

    # ---- additive bias shared by all heads: causal sentinel + scaled user mask.
    rows = lax.broadcasted_iota(jnp.int32, (Tq, S), 0) + q_start
    cols = lax.broadcasted_iota(jnp.int32, (Tq, S), 1)
    causal = jnp.where(cols > rows, jnp.float32(_NEG_LARGE), jnp.float32(0.0))
    add_mask = mask_ref[0, 0].astype(jnp.float32) * inv_sqrt_d              # [1,S] or [Tq,S]
    bias = causal + add_mask                                                # [Tq, S]

    # ---- per-head attention; outputs written into a [Tq, E] scratch at lane
    #      offset h*head_dim (no transposes, no concatenate). ----
    for h in range(num_heads):
        lo = h * head_dim
        qh = q_b[:, lo:lo + head_dim]                                       # [Tq, D] bf16
        kh = k_scr[:, lo:lo + head_dim]                                     # [S,  D] bf16
        vh = v_scr[:, lo:lo + head_dim]                                     # [S,  D] bf16

        # q @ k^T expressed via contracting dims (no explicit .T / XLU transpose).
        s = lax.dot_general(qh, kh, (((1,), (1,)), ((), ())),
                            preferred_element_type=jnp.float32)             # [Tq, S]
        s = s + bias

        m = jnp.max(s, axis=-1, keepdims=True)
        e = jnp.exp(s - m)
        p = e * pl.reciprocal(jnp.sum(e, axis=-1, keepdims=True), approx=True)
        # TODO(synk): attention/residual dropout omitted (identity in eval mode).

        acc_scr[:, lo:lo + head_dim] = jnp.dot(
            p.astype(jnp.bfloat16), vh, preferred_element_type=jnp.float32)

    # ---- residual + LayerNorm over the embedding dim (f32). ----
    res = xq + acc_scr[...]
    mean = jnp.mean(res, axis=-1, keepdims=True)
    var = jnp.mean(jnp.square(res - mean), axis=-1, keepdims=True)
    normed = (res - mean) * lax.rsqrt(var + ln_eps)
    out = normed * gamma_ref[...] + beta_ref[...]
    o_ref[...] = out[None].astype(o_ref.dtype)


def _pick_block_q(seq_len, target=256):
    """Largest query tile <= target that divides S and is a multiple of 8."""
    if seq_len <= target:
        return seq_len
    for bq in range(target, 7, -1):
        if seq_len % bq == 0 and bq % 8 == 0:
            return bq
    return seq_len


def masked_multihead_attention(x, attn_mask, params, *, num_heads, ln_eps=1e-5,
                               block_q=None):
    """x: [B,S,E] f32. attn_mask: additive, [B,1,S,S] or compact [B,1,1,S]."""
    B, S, E = x.shape
    assert E % num_heads == 0
    head_dim = E // num_heads

    wq, bq, wk, bk, wv, bv, gamma, beta = params
    # bf16 weights: ~2-4x MXU throughput, half the HBM traffic / VMEM footprint.
    wq = wq.astype(jnp.bfloat16)
    wk = wk.astype(jnp.bfloat16)
    wv = wv.astype(jnp.bfloat16)
    bq = bq.astype(jnp.float32).reshape(1, E)
    bk = bk.astype(jnp.float32).reshape(1, E)
    bv = bv.astype(jnp.float32).reshape(1, E)
    gamma = gamma.astype(jnp.float32).reshape(1, E)
    beta = beta.astype(jnp.float32).reshape(1, E)

    if block_q is None:
        block_q = _pick_block_q(S)
    assert S % block_q == 0
    n_q = S // block_q

    mask_rows = attn_mask.shape[2]
    if mask_rows == 1:
        # key-padding style mask [B,1,1,S]: ~S x less DMA/VMEM than a dense mask.
        mask_spec = pl.BlockSpec((1, 1, 1, S), lambda b, qi: (b, 0, 0, 0))
        mrb = 1
    else:
        assert mask_rows == S
        mask_spec = pl.BlockSpec((1, 1, block_q, S), lambda b, qi: (b, 0, qi, 0))
        mrb = block_q

    kernel = functools.partial(_mmha_kernel, num_heads=num_heads,
                               head_dim=head_dim, ln_eps=ln_eps)
    const = lambda b, qi: (0, 0)

    # Rough VMEM budget (double-buffered blocks + scratch + live tiles),
    # clamped so it stays under v7x's 64 MiB physical VMEM.
    est = (2 * S * E * 4 +          # x block
           2 * mrb * S * 4 +        # mask block
           2 * 3 * E * E * 2 +      # Wq/Wk/Wv (bf16)
           2 * 5 * E * 4 +          # biases + layernorm params
           2 * block_q * E * 4 +    # output block
           2 * S * E * 2 +          # K/V scratch (bf16)
           block_q * E * 4 +        # merged-head accumulator scratch
           4 * block_q * S * 4 +    # live score / prob tiles
           4 * block_q * E * 4)     # misc live activations
    vmem_limit = int(min(max(est * 3 // 2, 32 * 1024 * 1024), 64 * 1024 * 1024))

    return pl.pallas_call(
        kernel,
        out_shape=jax.ShapeDtypeStruct((B, S, E), x.dtype),
        grid=(B, n_q),
        in_specs=[
            pl.BlockSpec((1, S, E), lambda b, qi: (b, 0, 0)),  # x (full seq per batch)
            mask_spec,                                         # additive attention mask
            pl.BlockSpec((E, E), const),                       # Wq (bf16)
            pl.BlockSpec((1, E), const),                       # bq
            pl.BlockSpec((E, E), const),                       # Wk (bf16)
            pl.BlockSpec((1, E), const),                       # bk
            pl.BlockSpec((E, E), const),                       # Wv (bf16)
            pl.BlockSpec((1, E), const),                       # bv
            pl.BlockSpec((1, E), const),                       # LN gamma
            pl.BlockSpec((1, E), const),                       # LN beta
        ],
        out_specs=pl.BlockSpec((1, block_q, E), lambda b, qi: (b, qi, 0)),
        scratch_shapes=[
            pltpu.VMEM((S, E), jnp.bfloat16),       # K (whole sequence, per batch)
            pltpu.VMEM((S, E), jnp.bfloat16),       # V
            pltpu.VMEM((block_q, E), jnp.float32),  # merged-head attention output
        ],
        compiler_params=pltpu.CompilerParams(
            # batch axis "parallel" (megacore); query-tile axis "arbitrary"
            # because the K/V scratch filled at qi == 0 is reused by later tiles.
            dimension_semantics=("parallel", "arbitrary"),
            vmem_limit_bytes=vmem_limit),
    )(x, attn_mask, wq, bq, wk, bk, wv, bv, gamma, beta)


def _reference_f32(x, attn_mask, params, *, num_heads, ln_eps=1e-5):
    """Pure-f32 JAX mirror of the PyTorch forward (eval mode)."""
    wq, bq, wk, bk, wv, bv, gamma, beta = params
    B, S, E = x.shape
    D = E // num_heads

    def proj(w, b):
        y = x @ w + b.reshape(1, 1, E)
        return y.reshape(B, S, num_heads, D).transpose(0, 2, 1, 3)

    q, k, v = proj(wq, bq), proj(wk, bk), proj(wv, bv)
    s = jnp.einsum('bhqd,bhkd->bhqk', q, k)
    causal = jnp.triu(jnp.ones((S, S)), k=1).astype(bool)
    s = s + jnp.where(causal, -jnp.inf, 0.0)[None, None]
    s = s + attn_mask
    s = s / jnp.sqrt(jnp.float32(D))
    p = jax.nn.softmax(s, axis=-1)
    o = jnp.einsum('bhqk,bhkd->bhqd', p, v)
    o = o.transpose(0, 2, 1, 3).reshape(B, S, E)
    res = x + o
    mean = res.mean(-1, keepdims=True)
    var = ((res - mean) ** 2).mean(-1, keepdims=True)
    return ((res - mean) * lax.rsqrt(var + ln_eps)
            * gamma.reshape(1, 1, E) + beta.reshape(1, 1, E))


def _reference_mixed(x, attn_mask, params, *, num_heads, ln_eps=1e-5):
    """Same math with the kernel's mixed-precision policy (bf16 MXU inputs,
    f32 accumulation, scale folded into q) for a tight numerical check."""
    wq, bq, wk, bk, wv, bv, gamma, beta = params
    B, S, E = x.shape
    D = E // num_heads
    inv = 1.0 / math.sqrt(D)
    bf = jnp.bfloat16
    xb = x.astype(bf)

    def proj(w, b):
        y = jnp.einsum('bse,ef->bsf', xb, w.astype(bf),
                       preferred_element_type=jnp.float32)
        return y + b.reshape(1, 1, E)

    def heads(t):
        return t.reshape(B, S, num_heads, D).transpose(0, 2, 1, 3).astype(bf)

    q = heads(proj(wq, bq) * inv)
    k = heads(proj(wk, bk))
    v = heads(proj(wv, bv))
    s = jnp.einsum('bhqd,bhkd->bhqk', q, k, preferred_element_type=jnp.float32)
    causal = jnp.triu(jnp.ones((S, S)), k=1).astype(bool)
    s = s + jnp.where(causal, _NEG_LARGE, 0.0)[None, None]
    s = s + attn_mask * inv
    p = jax.nn.softmax(s, axis=-1)
    o = jnp.einsum('bhqk,bhkd->bhqd', p.astype(bf), v,
                   preferred_element_type=jnp.float32)
    o = o.transpose(0, 2, 1, 3).reshape(B, S, E)
    res = x + o
    mean = res.mean(-1, keepdims=True)
    var = ((res - mean) ** 2).mean(-1, keepdims=True)
    return ((res - mean) * lax.rsqrt(var + ln_eps)
            * gamma.reshape(1, 1, E) + beta.reshape(1, 1, E))


if __name__ == "__main__":
    B, S, E, H = 2, 8, 32, 4          # batch, seq, emb_dim, num_heads
    key = jax.random.PRNGKey(0)
    kx, kq, kk, kv, kbq, kbk, kbv, kmask = jax.random.split(key, 8)

    x = jax.random.normal(kx, (B, S, E), dtype=jnp.float32)

    scale = 1.0 / math.sqrt(E)
    wq = jax.random.normal(kq, (E, E), jnp.float32) * scale
    wk = jax.random.normal(kk, (E, E), jnp.float32) * scale
    wv = jax.random.normal(kv, (E, E), jnp.float32) * scale
    bq = jax.random.normal(kbq, (1, E), jnp.float32) * 0.01
    bk = jax.random.normal(kbk, (1, E), jnp.float32) * 0.01
    bv = jax.random.normal(kbv, (1, E), jnp.float32) * 0.01
    gamma = jnp.ones((1, E), jnp.float32)
    beta = jnp.zeros((1, E), jnp.float32)
    params = (wq, bq, wk, bk, wv, bv, gamma, beta)

    # Additive key-padding mask: 0 where attended, -1e9 where masked.
    pad = jax.random.bernoulli(kmask, p=0.2, shape=(B, 1, 1, S))
    row_mask = jnp.where(pad, -1e9, 0.0).astype(jnp.float32)     # compact [B,1,1,S]
    full_mask = jnp.broadcast_to(row_mask, (B, 1, S, S))         # dense [B,1,S,S]

    out = masked_multihead_attention(x, row_mask, params, num_heads=H)
    out = jax.block_until_ready(out)
    assert out.shape == (B, S, E)
    assert not bool(jnp.any(jnp.isnan(out)))

    # Tight check vs. a reference with the same mixed-precision policy.
    ref_mixed = _reference_mixed(x, row_mask, params, num_heads=H)
    assert jnp.allclose(out, ref_mixed, atol=2e-2, rtol=2e-2), \
        f"mixed-ref max abs diff {jnp.max(jnp.abs(out - ref_mixed))}"

    # Looser check vs. the pure-f32 PyTorch-equivalent reference
    # (remaining difference is the expected bf16 quantization, not semantics).
    ref_f32 = _reference_f32(x, row_mask, params, num_heads=H)
    assert jnp.allclose(out, ref_f32, atol=1.5e-1, rtol=1.5e-1), \
        f"f32-ref max abs diff {jnp.max(jnp.abs(out - ref_f32))}"

    # Dense [B,1,S,S] additive masks (the original module API) are also supported.
    out_dense = masked_multihead_attention(x, full_mask, params, num_heads=H)
    out_dense = jax.block_until_ready(out_dense)
    assert jnp.allclose(out, out_dense, atol=1e-5, rtol=1e-5)

    print("KERNEL_OK")
</pallas_src>

<mosaic_0001>
module attributes {stable_mosaic.version = 11 : i64} {
  func.func @_mmha_kernel(%arg0: i32, %arg1: i32, %arg2: memref<1x8x32xf32, #tpu.memory_space<vmem>>, %arg3: memref<1x1x1x8xf32, #tpu.memory_space<vmem>>, %arg4: memref<32x32xbf16, #tpu.memory_space<vmem>>, %arg5: memref<1x32xf32, #tpu.memory_space<vmem>>, %arg6: memref<32x32xbf16, #tpu.memory_space<vmem>>, %arg7: memref<1x32xf32, #tpu.memory_space<vmem>>, %arg8: memref<32x32xbf16, #tpu.memory_space<vmem>>, %arg9: memref<1x32xf32, #tpu.memory_space<vmem>>, %arg10: memref<1x32xf32, #tpu.memory_space<vmem>>, %arg11: memref<1x32xf32, #tpu.memory_space<vmem>>, %arg12: memref<1x8x32xf32, #tpu.memory_space<vmem>>, %arg13: memref<8x32xbf16, #tpu.memory_space<vmem>>, %arg14: memref<8x32xbf16, #tpu.memory_space<vmem>>, %arg15: memref<8x32xf32, #tpu.memory_space<vmem>>) attributes {dimension_semantics = [#tpu.dimension_semantics<parallel>, #tpu.dimension_semantics<arbitrary>], iteration_bounds = array<i64: 2, 1>, scalar_prefetch = 0 : i64, scratch_operands = 3 : i64, tpu.core_type = #tpu.core_type<tc>, window_params = [{transform_indices = @transform_0, window_bounds = array<i64: 1, 8, 32>}, {transform_indices = @transform_1, window_bounds = array<i64: 1, 1, 1, 8>}, {pipeline_mode = #tpu.pipeline_mode<synchronous>, transform_indices = @transform_2, window_bounds = array<i64: 32, 32>}, {pipeline_mode = #tpu.pipeline_mode<synchronous>, transform_indices = @transform_3, window_bounds = array<i64: 1, 32>}, {pipeline_mode = #tpu.pipeline_mode<synchronous>, transform_indices = @transform_4, window_bounds = array<i64: 32, 32>}, {pipeline_mode = #tpu.pipeline_mode<synchronous>, transform_indices = @transform_5, window_bounds = array<i64: 1, 32>}, {pipeline_mode = #tpu.pipeline_mode<synchronous>, transform_indices = @transform_6, window_bounds = array<i64: 32, 32>}, {pipeline_mode = #tpu.pipeline_mode<synchronous>, transform_indices = @transform_7, window_bounds = array<i64: 1, 32>}, {pipeline_mode = #tpu.pipeline_mode<synchronous>, transform_indices = @transform_8, window_bounds = array<i64: 1, 32>}, {pipeline_mode = #tpu.pipeline_mode<synchronous>, transform_indices = @transform_9, window_bounds = array<i64: 1, 32>}, {transform_indices = @transform_10, window_bounds = array<i64: 1, 8, 32>}]} {
    %c8_i32 = arith.constant 8 : i32
    %0 = arith.muli %arg1, %c8_i32 : i32
    %1 = tpu.assume_multiple %0, 8 : i32
    %c0_i32 = arith.constant 0 : i32
    %2 = arith.cmpi eq, %arg1, %c0_i32 : i32
    %3 = arith.extui %2 : i1 to i32
    %c0_i32_0 = arith.constant 0 : i32
    %4 = arith.cmpi ne, %3, %c0_i32_0 : i32
    scf.if %4 {
      %c0_65 = arith.constant 0 : index
      %c0_66 = arith.constant 0 : index
      %c0_67 = arith.constant 0 : index
      %131 = vector.load %arg2[%c0_65, %c0_66, %c0_67] : memref<1x8x32xf32, #tpu.memory_space<vmem>>, vector<1x8x32xf32>
      %132 = vector.shape_cast %131 : vector<1x8x32xf32> to vector<8x32xf32>
      %133 = arith.truncf %132 : vector<8x32xf32> to vector<8x32xbf16>
      %c0_68 = arith.constant 0 : index
      %c0_69 = arith.constant 0 : index
      %134 = vector.load %arg6[%c0_68, %c0_69] : memref<32x32xbf16, #tpu.memory_space<vmem>>, vector<32x32xbf16>
      %cst_70 = arith.constant dense<0.000000e+00> : vector<8x32xf32>
      %135 = tpu.matmul %133, %134, %cst_70 {dimension_numbers = #tpu.dot_dimension_numbers<[1], [0], [0], [1], [0, 0, 1, 1], [], []>} : vector<8x32xbf16>, vector<32x32xbf16>, vector<8x32xf32> -> vector<8x32xf32>
      %c0_71 = arith.constant 0 : index
      %c0_72 = arith.constant 0 : index
      %136 = vector.load %arg7[%c0_71, %c0_72] : memref<1x32xf32, #tpu.memory_space<vmem>>, vector<1x32xf32>
      %137 = vector.broadcast %136 : vector<1x32xf32> to vector<8x32xf32>
      %138 = arith.addf %135, %137 : vector<8x32xf32>
      %c0_73 = arith.constant 0 : index
      %c0_74 = arith.constant 0 : index
      %139 = vector.load %arg8[%c0_73, %c0_74] : memref<32x32xbf16, #tpu.memory_space<vmem>>, vector<32x32xbf16>
      %cst_75 = arith.constant dense<0.000000e+00> : vector<8x32xf32>
      %140 = tpu.matmul %133, %139, %cst_75 {dimension_numbers = #tpu.dot_dimension_numbers<[1], [0], [0], [1], [0, 0, 1, 1], [], []>} : vector<8x32xbf16>, vector<32x32xbf16>, vector<8x32xf32> -> vector<8x32xf32>
      %c0_76 = arith.constant 0 : index
      %c0_77 = arith.constant 0 : index
      %141 = vector.load %arg9[%c0_76, %c0_77] : memref<1x32xf32, #tpu.memory_space<vmem>>, vector<1x32xf32>
      %142 = vector.broadcast %141 : vector<1x32xf32> to vector<8x32xf32>
      %143 = arith.addf %140, %142 : vector<8x32xf32>
      %144 = arith.truncf %138 : vector<8x32xf32> to vector<8x32xbf16>
      %c0_78 = arith.constant 0 : index
      %c0_79 = arith.constant 0 : index
      %145 = vector.load %arg13[%c0_78, %c0_79] : memref<8x32xbf16, #tpu.memory_space<vmem>>, vector<8x32xbf16>
      tpu.vector_store %arg13[%c0_78, %c0_79], %144 {strides = array<i32>} : memref<8x32xbf16, #tpu.memory_space<vmem>>, vector<8x32xbf16>,
      %146 = arith.truncf %143 : vector<8x32xf32> to vector<8x32xbf16>
      %c0_80 = arith.constant 0 : index
      %c0_81 = arith.constant 0 : index
      %147 = vector.load %arg14[%c0_80, %c0_81] : memref<8x32xbf16, #tpu.memory_space<vmem>>, vector<8x32xbf16>
      tpu.vector_store %arg14[%c0_80, %c0_81], %146 {strides = array<i32>} : memref<8x32xbf16, #tpu.memory_space<vmem>>, vector<8x32xbf16>,
    } else {
    }
    %c0 = arith.constant 0 : index
    %5 = arith.index_cast %1 : i32 to index
    %c0_1 = arith.constant 0 : index
    %6 = vector.load %arg2[%c0, %5, %c0_1] : memref<1x8x32xf32, #tpu.memory_space<vmem>>, vector<1x8x32xf32>
    %7 = vector.shape_cast %6 : vector<1x8x32xf32> to vector<8x32xf32>
    %8 = arith.truncf %7 : vector<8x32xf32> to vector<8x32xbf16>
    %c0_2 = arith.constant 0 : index
    %c0_3 = arith.constant 0 : index
    %9 = vector.load %arg4[%c0_2, %c0_3] : memref<32x32xbf16, #tpu.memory_space<vmem>>, vector<32x32xbf16>
    %cst = arith.constant dense<0.000000e+00> : vector<8x32xf32>
    %10 = tpu.matmul %8, %9, %cst {dimension_numbers = #tpu.dot_dimension_numbers<[1], [0], [0], [1], [0, 0, 1, 1], [], []>} : vector<8x32xbf16>, vector<32x32xbf16>, vector<8x32xf32> -> vector<8x32xf32>
    %c0_4 = arith.constant 0 : index
    %c0_5 = arith.constant 0 : index
    %11 = vector.load %arg5[%c0_4, %c0_5] : memref<1x32xf32, #tpu.memory_space<vmem>>, vector<1x32xf32>
    %12 = vector.broadcast %11 : vector<1x32xf32> to vector<8x32xf32>
    %13 = arith.addf %10, %12 : vector<8x32xf32>
    %cst_6 = arith.constant 0.353553385 : f32
    %14 = vector.broadcast %cst_6 : f32 to vector<8x32xf32>
    %15 = arith.mulf %13, %14 : vector<8x32xf32>
    %16 = arith.truncf %15 : vector<8x32xf32> to vector<8x32xbf16>
    %17 = tpu.iota {dimensions = array<i32: 0>} : vector<8x8xi32>
    %18 = vector.broadcast %1 : i32 to vector<8x8xi32>
    %19 = arith.addi %17, %18 : vector<8x8xi32>
    %20 = tpu.iota {dimensions = array<i32: 1>} : vector<8x8xi32>
    %21 = arith.cmpi sgt, %20, %19 : vector<8x8xi32>
    %cst_7 = arith.constant -1.000000e+30 : f32
    %cst_8 = arith.constant 0.000000e+00 : f32
    %22 = vector.broadcast %cst_7 : f32 to vector<8x8xf32>
    %23 = vector.broadcast %cst_8 : f32 to vector<8x8xf32>
    %24 = arith.select %21, %22, %23 : vector<8x8xi1>, vector<8x8xf32>
    %c0_9 = arith.constant 0 : index
    %c0_10 = arith.constant 0 : index
    %c0_11 = arith.constant 0 : index
    %c0_12 = arith.constant 0 : index
    %25 = vector.load %arg3[%c0_9, %c0_10, %c0_11, %c0_12] : memref<1x1x1x8xf32, #tpu.memory_space<vmem>>, vector<1x1x1x8xf32>
    %26 = vector.shape_cast %25 : vector<1x1x1x8xf32> to vector<1x8xf32>
    %cst_13 = arith.constant 0.353553385 : f32
    %27 = vector.broadcast %cst_13 : f32 to vector<1x8xf32>
    %28 = arith.mulf %26, %27 : vector<1x8xf32>
    %29 = vector.broadcast %28 : vector<1x8xf32> to vector<8x8xf32>
    %30 = arith.addf %24, %29 : vector<8x8xf32>
    %31 = vector.extract_strided_slice %16 {offsets = [0, 0], sizes = [8, 8], strides = [1, 1]} : vector<8x32xbf16> to vector<8x8xbf16>
    %c0_14 = arith.constant 0 : index
    %c0_15 = arith.constant 0 : index
    %32 = vector.load %arg13[%c0_14, %c0_15] : memref<8x32xbf16, #tpu.memory_space<vmem>>, vector<8x8xbf16>
    %c0_16 = arith.constant 0 : index
    %c0_17 = arith.constant 0 : index
    %33 = vector.load %arg14[%c0_16, %c0_17] : memref<8x32xbf16, #tpu.memory_space<vmem>>, vector<8x8xbf16>
    %cst_18 = arith.constant dense<0.000000e+00> : vector<8x8xf32>
    %34 = tpu.matmul %31, %32, %cst_18 {dimension_numbers = #tpu.dot_dimension_numbers<[1], [1], [0], [0], [0, 0, 1, 0], [], []>} : vector<8x8xbf16>, vector<8x8xbf16>, vector<8x8xf32> -> vector<8x8xf32>
    %35 = arith.addf %34, %30 : vector<8x8xf32>
    %cst_19 = arith.constant dense<0xFF800000> : vector<8xf32>
    %36 = vector.multi_reduction <maximumf>, %35, %cst_19 [1] : vector<8x8xf32> to vector<8xf32>
    %37 = vector.shape_cast %36 : vector<8xf32> to vector<8x1xf32>
    %38 = vector.broadcast %37 : vector<8x1xf32> to vector<8x8xf32>
    %39 = arith.subf %35, %38 : vector<8x8xf32>
    %40 = math.exp %39 : vector<8x8xf32>
    %cst_20 = arith.constant dense<0.000000e+00> : vector<8xf32>
    %41 = vector.multi_reduction <add>, %40, %cst_20 [1] : vector<8x8xf32> to vector<8xf32>
    %42 = vector.shape_cast %41 : vector<8xf32> to vector<8x1xf32>
    %43 = tpu.reciprocal %42 {approx = true} : vector<8x1xf32> -> vector<8x1xf32>
    %44 = vector.broadcast %43 : vector<8x1xf32> to vector<8x8xf32>
    %45 = arith.mulf %40, %44 : vector<8x8xf32>
    %46 = arith.truncf %45 : vector<8x8xf32> to vector<8x8xbf16>
    %cst_21 = arith.constant dense<0.000000e+00> : vector<8x8xf32>
    %47 = tpu.matmul %46, %33, %cst_21 {dimension_numbers = #tpu.dot_dimension_numbers<[1], [0], [0], [1], [0, 0, 1, 1], [], []>} : vector<8x8xbf16>, vector<8x8xbf16>, vector<8x8xf32> -> vector<8x8xf32>
    %c0_22 = arith.constant 0 : index
    %c0_23 = arith.constant 0 : index
    %48 = vector.load %arg15[%c0_22, %c0_23] : memref<8x32xf32, #tpu.memory_space<vmem>>, vector<8x8xf32>
    tpu.vector_store %arg15[%c0_22, %c0_23], %47 {strides = array<i32>} : memref<8x32xf32, #tpu.memory_space<vmem>>, vector<8x8xf32>,
    %49 = vector.extract_strided_slice %16 {offsets = [0, 8], sizes = [8, 8], strides = [1, 1]} : vector<8x32xbf16> to vector<8x8xbf16>
    %c0_24 = arith.constant 0 : index
    %c8 = arith.constant 8 : index
    %50 = vector.load %arg13[%c0_24, %c8] : memref<8x32xbf16, #tpu.memory_space<vmem>>, vector<8x8xbf16>
    %c0_25 = arith.constant 0 : index
    %c8_26 = arith.constant 8 : index
    %51 = vector.load %arg14[%c0_25, %c8_26] : memref<8x32xbf16, #tpu.memory_space<vmem>>, vector<8x8xbf16>
    %cst_27 = arith.constant dense<0.000000e+00> : vector<8x8xf32>
    %52 = tpu.matmul %49, %50, %cst_27 {dimension_numbers = #tpu.dot_dimension_numbers<[1], [1], [0], [0], [0, 0, 1, 0], [], []>} : vector<8x8xbf16>, vector<8x8xbf16>, vector<8x8xf32> -> vector<8x8xf32>
    %53 = arith.addf %52, %30 : vector<8x8xf32>
    %cst_28 = arith.constant dense<0xFF800000> : vector<8xf32>
    %54 = vector.multi_reduction <maximumf>, %53, %cst_28 [1] : vector<8x8xf32> to vector<8xf32>
    %55 = vector.shape_cast %54 : vector<8xf32> to vector<8x1xf32>
    %56 = vector.broadcast %55 : vector<8x1xf32> to vector<8x8xf32>
    %57 = arith.subf %53, %56 : vector<8x8xf32>
    %58 = math.exp %57 : vector<8x8xf32>
    %cst_29 = arith.constant dense<0.000000e+00> : vector<8xf32>
    %59 = vector.multi_reduction <add>, %58, %cst_29 [1] : vector<8x8xf32> to vector<8xf32>
    %60 = vector.shape_cast %59 : vector<8xf32> to vector<8x1xf32>
    %61 = tpu.reciprocal %60 {approx = true} : vector<8x1xf32> -> vector<8x1xf32>
    %62 = vector.broadcast %61 : vector<8x1xf32> to vector<8x8xf32>
    %63 = arith.mulf %58, %62 : vector<8x8xf32>
    %64 = arith.truncf %63 : vector<8x8xf32> to vector<8x8xbf16>
    %cst_30 = arith.constant dense<0.000000e+00> : vector<8x8xf32>
    %65 = tpu.matmul %64, %51, %cst_30 {dimension_numbers = #tpu.dot_dimension_numbers<[1], [0], [0], [1], [0, 0, 1, 1], [], []>} : vector<8x8xbf16>, vector<8x8xbf16>, vector<8x8xf32> -> vector<8x8xf32>
    %c0_31 = arith.constant 0 : index
    %c8_32 = arith.constant 8 : index
    %66 = vector.load %arg15[%c0_31, %c8_32] : memref<8x32xf32, #tpu.memory_space<vmem>>, vector<8x8xf32>
    tpu.vector_store %arg15[%c0_31, %c8_32], %65 {strides = array<i32>} : memref<8x32xf32, #tpu.memory_space<vmem>>, vector<8x8xf32>,
    %67 = vector.extract_strided_slice %16 {offsets = [0, 16], sizes = [8, 8], strides = [1, 1]} : vector<8x32xbf16> to vector<8x8xbf16>
    %c0_33 = arith.constant 0 : index
    %c16 = arith.constant 16 : index
    %68 = vector.load %arg13[%c0_33, %c16] : memref<8x32xbf16, #tpu.memory_space<vmem>>, vector<8x8xbf16>
    %c0_34 = arith.constant 0 : index
    %c16_35 = arith.constant 16 : index
    %69 = vector.load %arg14[%c0_34, %c16_35] : memref<8x32xbf16, #tpu.memory_space<vmem>>, vector<8x8xbf16>
    %cst_36 = arith.constant dense<0.000000e+00> : vector<8x8xf32>
    %70 = tpu.matmul %67, %68, %cst_36 {dimension_numbers = #tpu.dot_dimension_numbers<[1], [1], [0], [0], [0, 0, 1, 0], [], []>} : vector<8x8xbf16>, vector<8x8xbf16>, vector<8x8xf32> -> vector<8x8xf32>
    %71 = arith.addf %70, %30 : vector<8x8xf32>
    %cst_37 = arith.constant dense<0xFF800000> : vector<8xf32>
    %72 = vector.multi_reduction <maximumf>, %71, %cst_37 [1] : vector<8x8xf32> to vector<8xf32>
    %73 = vector.shape_cast %72 : vector<8xf32> to vector<8x1xf32>
    %74 = vector.broadcast %73 : vector<8x1xf32> to vector<8x8xf32>
    %75 = arith.subf %71, %74 : vector<8x8xf32>
    %76 = math.exp %75 : vector<8x8xf32>
    %cst_38 = arith.constant dense<0.000000e+00> : vector<8xf32>
    %77 = vector.multi_reduction <add>, %76, %cst_38 [1] : vector<8x8xf32> to vector<8xf32>
    %78 = vector.shape_cast %77 : vector<8xf32> to vector<8x1xf32>
    %79 = tpu.reciprocal %78 {approx = true} : vector<8x1xf32> -> vector<8x1xf32>
    %80 = vector.broadcast %79 : vector<8x1xf32> to vector<8x8xf32>
    %81 = arith.mulf %76, %80 : vector<8x8xf32>
    %82 = arith.truncf %81 : vector<8x8xf32> to vector<8x8xbf16>
    %cst_39 = arith.constant dense<0.000000e+00> : vector<8x8xf32>
    %83 = tpu.matmul %82, %69, %cst_39 {dimension_numbers = #tpu.dot_dimension_numbers<[1], [0], [0], [1], [0, 0, 1, 1], [], []>} : vector<8x8xbf16>, vector<8x8xbf16>, vector<8x8xf32> -> vector<8x8xf32>
    %c0_40 = arith.constant 0 : index
    %c16_41 = arith.constant 16 : index
    %84 = vector.load %arg15[%c0_40, %c16_41] : memref<8x32xf32, #tpu.memory_space<vmem>>, vector<8x8xf32>
    tpu.vector_store %arg15[%c0_40, %c16_41], %83 {strides = array<i32>} : memref<8x32xf32, #tpu.memory_space<vmem>>, vector<8x8xf32>,
    %85 = vector.extract_strided_slice %16 {offsets = [0, 24], sizes = [8, 8], strides = [1, 1]} : vector<8x32xbf16> to vector<8x8xbf16>
    %c0_42 = arith.constant 0 : index
    %c24 = arith.constant 24 : index
    %86 = vector.load %arg13[%c0_42, %c24] : memref<8x32xbf16, #tpu.memory_space<vmem>>, vector<8x8xbf16>
    %c0_43 = arith.constant 0 : index
    %c24_44 = arith.constant 24 : index
    %87 = vector.load %arg14[%c0_43, %c24_44] : memref<8x32xbf16, #tpu.memory_space<vmem>>, vector<8x8xbf16>
    %cst_45 = arith.constant dense<0.000000e+00> : vector<8x8xf32>
    %88 = tpu.matmul %85, %86, %cst_45 {dimension_numbers = #tpu.dot_dimension_numbers<[1], [1], [0], [0], [0, 0, 1, 0], [], []>} : vector<8x8xbf16>, vector<8x8xbf16>, vector<8x8xf32> -> vector<8x8xf32>
    %89 = arith.addf %88, %30 : vector<8x8xf32>
    %cst_46 = arith.constant dense<0xFF800000> : vector<8xf32>
    %90 = vector.multi_reduction <maximumf>, %89, %cst_46 [1] : vector<8x8xf32> to vector<8xf32>
    %91 = vector.shape_cast %90 : vector<8xf32> to vector<8x1xf32>
    %92 = vector.broadcast %91 : vector<8x1xf32> to vector<8x8xf32>
    %93 = arith.subf %89, %92 : vector<8x8xf32>
    %94 = math.exp %93 : vector<8x8xf32>
    %cst_47 = arith.constant dense<0.000000e+00> : vector<8xf32>
    %95 = vector.multi_reduction <add>, %94, %cst_47 [1] : vector<8x8xf32> to vector<8xf32>
    %96 = vector.shape_cast %95 : vector<8xf32> to vector<8x1xf32>
    %97 = tpu.reciprocal %96 {approx = true} : vector<8x1xf32> -> vector<8x1xf32>
    %98 = vector.broadcast %97 : vector<8x1xf32> to vector<8x8xf32>
    %99 = arith.mulf %94, %98 : vector<8x8xf32>
    %100 = arith.truncf %99 : vector<8x8xf32> to vector<8x8xbf16>
    %cst_48 = arith.constant dense<0.000000e+00> : vector<8x8xf32>
    %101 = tpu.matmul %100, %87, %cst_48 {dimension_numbers = #tpu.dot_dimension_numbers<[1], [0], [0], [1], [0, 0, 1, 1], [], []>} : vector<8x8xbf16>, vector<8x8xbf16>, vector<8x8xf32> -> vector<8x8xf32>
    %c0_49 = arith.constant 0 : index
    %c24_50 = arith.constant 24 : index
    %102 = vector.load %arg15[%c0_49, %c24_50] : memref<8x32xf32, #tpu.memory_space<vmem>>, vector<8x8xf32>
    tpu.vector_store %arg15[%c0_49, %c24_50], %101 {strides = array<i32>} : memref<8x32xf32, #tpu.memory_space<vmem>>, vector<8x8xf32>,
    %c0_51 = arith.constant 0 : index
    %c0_52 = arith.constant 0 : index
    %103 = vector.load %arg15[%c0_51, %c0_52] : memref<8x32xf32, #tpu.memory_space<vmem>>, vector<8x32xf32>
    %104 = arith.addf %7, %103 : vector<8x32xf32>
    %cst_53 = arith.constant dense<0.000000e+00> : vector<8xf32>
    %105 = vector.multi_reduction <add>, %104, %cst_53 [1] : vector<8x32xf32> to vector<8xf32>
    %106 = vector.shape_cast %105 : vector<8xf32> to vector<8x1xf32>
    %cst_54 = arith.constant 3.200000e+01 : f32
    %107 = vector.broadcast %cst_54 : f32 to vector<8x1xf32>
    %108 = arith.divf %106, %107 : vector<8x1xf32>
    %109 = vector.broadcast %108 : vector<8x1xf32> to vector<8x32xf32>
    %110 = arith.subf %104, %109 : vector<8x32xf32>
    %111 = arith.mulf %110, %110 : vector<8x32xf32>
    %cst_55 = arith.constant dense<0.000000e+00> : vector<8xf32>
    %112 = vector.multi_reduction <add>, %111, %cst_55 [1] : vector<8x32xf32> to vector<8xf32>
    %113 = vector.shape_cast %112 : vector<8xf32> to vector<8x1xf32>
    %cst_56 = arith.constant 3.200000e+01 : f32
    %114 = vector.broadcast %cst_56 : f32 to vector<8x1xf32>
    %115 = arith.divf %113, %114 : vector<8x1xf32>
    %116 = vector.broadcast %108 : vector<8x1xf32> to vector<8x32xf32>
    %117 = arith.subf %104, %116 : vector<8x32xf32>
    %cst_57 = arith.constant 9.99999974E-6 : f32
    %118 = vector.broadcast %cst_57 : f32 to vector<8x1xf32>
    %119 = arith.addf %115, %118 : vector<8x1xf32>
    %120 = math.rsqrt %119 : vector<8x1xf32>
    %121 = vector.broadcast %120 : vector<8x1xf32> to vector<8x32xf32>
    %122 = arith.mulf %117, %121 : vector<8x32xf32>
    %c0_58 = arith.constant 0 : index
    %c0_59 = arith.constant 0 : index
    %123 = vector.load %arg10[%c0_58, %c0_59] : memref<1x32xf32, #tpu.memory_space<vmem>>, vector<1x32xf32>
    %124 = vector.broadcast %123 : vector<1x32xf32> to vector<8x32xf32>
    %125 = arith.mulf %122, %124 : vector<8x32xf32>
    %c0_60 = arith.constant 0 : index
    %c0_61 = arith.constant 0 : index
    %126 = vector.load %arg11[%c0_60, %c0_61] : memref<1x32xf32, #tpu.memory_space<vmem>>, vector<1x32xf32>
    %127 = vector.broadcast %126 : vector<1x32xf32> to vector<8x32xf32>
    %128 = arith.addf %125, %127 : vector<8x32xf32>
    %129 = vector.shape_cast %128 : vector<8x32xf32> to vector<1x8x32xf32>
    %c0_62 = arith.constant 0 : index
    %c0_63 = arith.constant 0 : index
    %c0_64 = arith.constant 0 : index
    %130 = vector.load %arg12[%c0_62, %c0_63, %c0_64] : memref<1x8x32xf32, #tpu.memory_space<vmem>>, vector<1x8x32xf32>
    tpu.vector_store %arg12[%c0_62, %c0_63, %c0_64], %129 {strides = array<i32>} : memref<1x8x32xf32, #tpu.memory_space<vmem>>, vector<1x8x32xf32>,
    return
  }
  func.func @transform_0(%arg0: i32, %arg1: i32) -> (i32, i32, i32) {
    %c0_i32 = arith.constant 0 : i32
    %c0_i32_0 = arith.constant 0 : i32
    %c0_i32_1 = arith.constant 0 : i32
    return %arg0, %c0_i32, %c0_i32_0 : i32, i32, i32
  }
  func.func @transform_1(%arg0: i32, %arg1: i32) -> (i32, i32, i32, i32) {
    %c0_i32 = arith.constant 0 : i32
    %c0_i32_0 = arith.constant 0 : i32
    %c0_i32_1 = arith.constant 0 : i32
    %c0_i32_2 = arith.constant 0 : i32
    return %arg0, %c0_i32, %c0_i32_0, %c0_i32_1 : i32, i32, i32, i32
  }
  func.func @transform_2(%arg0: i32, %arg1: i32) -> (i32, i32) {
    %c0_i32 = arith.constant 0 : i32
    %c0_i32_0 = arith.constant 0 : i32
    %c0_i32_1 = arith.constant 0 : i32
    return %c0_i32, %c0_i32_0 : i32, i32
  }
  func.func @transform_3(%arg0: i32, %arg1: i32) -> (i32, i32) {
    %c0_i32 = arith.constant 0 : i32
    %c0_i32_0 = arith.constant 0 : i32
    %c0_i32_1 = arith.constant 0 : i32
    return %c0_i32, %c0_i32_0 : i32, i32
  }
  func.func @transform_4(%arg0: i32, %arg1: i32) -> (i32, i32) {
    %c0_i32 = arith.constant 0 : i32
    %c0_i32_0 = arith.constant 0 : i32
    %c0_i32_1 = arith.constant 0 : i32
    return %c0_i32, %c0_i32_0 : i32, i32
  }
  func.func @transform_5(%arg0: i32, %arg1: i32) -> (i32, i32) {
    %c0_i32 = arith.constant 0 : i32
    %c0_i32_0 = arith.constant 0 : i32
    %c0_i32_1 = arith.constant 0 : i32
    return %c0_i32, %c0_i32_0 : i32, i32
  }
  func.func @transform_6(%arg0: i32, %arg1: i32) -> (i32, i32) {
    %c0_i32 = arith.constant 0 : i32
    %c0_i32_0 = arith.constant 0 : i32
    %c0_i32_1 = arith.constant 0 : i32
    return %c0_i32, %c0_i32_0 : i32, i32
  }
  func.func @transform_7(%arg0: i32, %arg1: i32) -> (i32, i32) {
    %c0_i32 = arith.constant 0 : i32
    %c0_i32_0 = arith.constant 0 : i32
    %c0_i32_1 = arith.constant 0 : i32
    return %c0_i32, %c0_i32_0 : i32, i32
  }
  func.func @transform_8(%arg0: i32, %arg1: i32) -> (i32, i32) {
    %c0_i32 = arith.constant 0 : i32
    %c0_i32_0 = arith.constant 0 : i32
    %c0_i32_1 = arith.constant 0 : i32
    return %c0_i32, %c0_i32_0 : i32, i32
  }
  func.func @transform_9(%arg0: i32, %arg1: i32) -> (i32, i32) {
    %c0_i32 = arith.constant 0 : i32
    %c0_i32_0 = arith.constant 0 : i32
    %c0_i32_1 = arith.constant 0 : i32
    return %c0_i32, %c0_i32_0 : i32, i32
  }
  func.func @transform_10(%arg0: i32, %arg1: i32) -> (i32, i32, i32) {
    %c0_i32 = arith.constant 0 : i32
    %c0_i32_0 = arith.constant 0 : i32
    return %arg0, %arg1, %c0_i32 : i32, i32, i32
  }
}

</mosaic_0001>

<llo_original>
// kernel: tpu_custom_call.1
$region0: #{tpu_custom_call.1}
  #allocation0 [shape = 'u32[]', space=smem, size = 0x4, offset = 0x4, fixed_abs, tag = 'smem constant byte address 0x4 - core index']
  #allocation1 [shape = 'u32[144,128]{1,0:T(1,128)}', space=vmem, size = 0x12000, scoped, tag = 'internal scratch']
  #allocation2 [shape = 'bf16[8,32]{1,0:T(8,128)(2,1)}', space=vmem, size = 0x800, scoped, tag = 'scratch operand']
  #allocation3 [shape = 'bf16[8,32]{1,0:T(8,128)(2,1)}', space=vmem, size = 0x800, scoped, tag = 'scratch operand']
  #allocation4 [shape = 'f32[8,32]{1,0:T(8,128)}', space=vmem, size = 0x1000, scoped, tag = 'scratch operand']
  %s0 = inlined_call_operand.hbm [shape: f32[2,8,32], index: 0, kind: input, shape index: {}]
  %s1 = inlined_call_operand.hbm [shape: f32[2,1,1,8], index: 1, kind: input, shape index: {}]
  %s2 = inlined_call_operand.hbm [shape: bf16[32,32], index: 2, kind: input, shape index: {}]
  %s3 = inlined_call_operand.vmem [shape: f32[1,32], index: 3, kind: input, shape index: {}]
  %s4 = inlined_call_operand.hbm [shape: bf16[32,32], index: 4, kind: input, shape index: {}]
  %s5 = inlined_call_operand.vmem [shape: f32[1,32], index: 5, kind: input, shape index: {}]
  %s6 = inlined_call_operand.hbm [shape: bf16[32,32], index: 6, kind: input, shape index: {}]
  %s7 = inlined_call_operand.vmem [shape: f32[1,32], index: 7, kind: input, shape index: {}]
  %s8 = inlined_call_operand.vmem [shape: f32[1,32], index: 8, kind: input, shape index: {}]
  %s9 = inlined_call_operand.vmem [shape: f32[1,32], index: 9, kind: input, shape index: {}]
  %s10 = inlined_call_operand.hbm [shape: f32[2,8,32], index: 10, kind: output, shape index: {}]
  %s11 = sld [smem:[#allocation0]]
  $region97: #{tpu_custom_call.1} parent=0
    _
  %s13 = ssub.s32 1, %s11
  %s14 = scalar_select 0, %s13, %s11
  $region1: #{tpu_custom_call.1} parent=0
    #allocation5 [shape = 'u8[8192]{0}', space=vmem, size = 0x2000, scoped, tag = 'input window, operand 0']
    #allocation6 [shape = 's32[2]{0}', space=sflag, size = 0x8, scoped, tag = 'scoped memory for tpu_custom_call.1']
    #allocation7 [shape = 's32[2]{0}', space=sflag, size = 0x8, scoped, tag = 'scoped memory for tpu_custom_call.1']
    #allocation8 [shape = 'u8[1024]{0}', space=vmem, size = 0x400, scoped, tag = 'input window, operand 1']
    #allocation9 [shape = 's32[2]{0}', space=sflag, size = 0x8, scoped, tag = 'scoped memory for tpu_custom_call.1']
    #allocation10 [shape = 'u8[8192]{0}', space=vmem, size = 0x2000, scoped, tag = 'input window, operand 2, single buffered']
    #allocation11 [shape = 'u8[8192]{0}', space=vmem, size = 0x2000, scoped, tag = 'input window, operand 4, single buffered']
    #allocation12 [shape = 's32[1]{0}', space=sflag, size = 0x4, scoped, tag = 'scoped memory for tpu_custom_call.1']
    #allocation13 [shape = 'u8[8192]{0}', space=vmem, size = 0x2000, scoped, tag = 'input window, operand 6, single buffered']
    #allocation14 [shape = 'u8[8192]{0}', space=vmem, size = 0x2000, scoped, tag = 'output window, operand 0']
    %15 = vsyncpa [#allocation6], 0
    %s16 = scalar_lea.sflag [#allocation6], 1
    %17 = vsyncpa %s16, 0
    %18 = vsyncpa [#allocation9], 0
    %s19 = scalar_lea.sflag [#allocation9], 1
    %20 = vsyncpa %s19, 0
    %21 = vsyncpa [#allocation12], 0
    %22 = vsyncpa [#allocation7], 0
    %s23 = scalar_lea.sflag [#allocation7], 1
    %24 = vsyncpa %s23, 0
    loop: start=0, step=1, limit=4
    $region2: #{tpu_custom_call.1} parent=1 // loop_pre_header
      _
    $region3: #{tpu_custom_call.1} parent=1 // loop_header
      %s26 = sphi 0, %s30
      %p27 = scmp.ge.s32.totalorder %s26, 4
      %s33 = sphi 0, %s45
      %s34 = sphi 0, %s41
      %s35 = sphi 0, %s33
      %s36 = sphi 0, %s34
      %s37 = sphi 0, %s35
      %s38 = sphi 0, %s36
      %s48 = sphi 0, %s50
      %s51 = sphi 0, %s48
      %s52 = sphi 0, %s51
      %s68 = sphi 0, %s52
      %s74 = sphi 0, %s76
      %s77 = sphi 0, %s74
      %s78 = sphi 0, %s77
      %s94 = sphi 0, %s78
      %s98 = sphi 0, %s98
      %s100 = sphi 0, %s98
      %s101 = sphi 0, %s100
      %s115 = sphi 0, %s101
      %s119 = sphi 0, %s119
      %s121 = sphi 0, %s119
      %s122 = sphi 0, %s121
      %s136 = sphi 0, %s122
      %s140 = sphi 0, %s140
      %s142 = sphi 0, %s140
      %s143 = sphi 0, %s142
      %s157 = sphi 0, %s143
      %s161 = sphi 0, %s161
      %s163 = sphi 0, %s161
      %s164 = sphi 0, %s163
      %s178 = sphi 0, %s164
      %s182 = sphi 0, %s182
      %s184 = sphi 0, %s182
      %s185 = sphi 0, %s184
      %s199 = sphi 0, %s185
      %s203 = sphi 0, %s203
      %s205 = sphi 0, %s203
      %s206 = sphi 0, %s205
      %s220 = sphi 0, %s206
      %s224 = sphi 0, %s224
      %s226 = sphi 0, %s224
      %s227 = sphi 0, %s226
      %s241 = sphi 0, %s227
      %s245 = sphi 0, %s245
      %s247 = sphi 0, %s245
      %s248 = sphi 0, %s247
      %s262 = sphi 0, %s248
      %s270 = sphi 0, %s272
      %s273 = sphi 0, %s270
      %s274 = sphi 0, %s273
      %s290 = sphi 0, %s274
    $region4: #{tpu_custom_call.1} parent=1 // loop_header_branch
      %29 = sbr.rel (%p27) target = $region8
    $region5: #{tpu_custom_call.1} parent=1 // loop_body
      %s31 = ssub.s32 %s26, 1
      %s32 = ssub.s32 %s26, 2
      %s39 = sadd.s32 1, %s34
      %p40 = scmp.ge.s32.totalorder %s39, 1
      %s41 = scalar_select %p40, 0, %s39
      %s42 = sadd.s32 1, %s33
      %s43 = scalar_select %p40, %s42, %s33
      %p44 = scmp.ge.s32.totalorder %s43, 2
      %s45 = scalar_select %p44, 0, %s43
      %s46 = ssub.s32 %s33, %s45
      %p47 = scmp.eq.s32.totalorder %s46, 0
      %s49 = sadd.s32 %s48, 1
      %s50 = scalar_select %p47, %s48, %s49
      %p53 = pneg %p47
      %p54 = scmp.eq.s32.totalorder %s26, 1
      %p55 = por %p53, %p54
      %p56 = scmp.ne.s32.totalorder %s48, %s51
      %p57 = scmp.eq.s32.totalorder %s26, 0
      %p58 = por %p56, %p57
      %p59 = scmp.ne.s32.totalorder %s48, %s51
      %p60 = scmp.eq.s32.totalorder %s31, 1
      %p61 = por %p59, %p60
      %p62 = scmp.ne.s32.totalorder %s51, %s52
      %p63 = scmp.eq.s32.totalorder %s31, 0
      %p64 = por %p62, %p63
      %p65 = scmp.ne.s32.totalorder %s51, %s52
      %p66 = scmp.eq.s32.totalorder %s32, 1
      %p67 = por %p65, %p66
      %p69 = scmp.ne.s32.totalorder %s52, %s68
      %p70 = scmp.eq.s32.totalorder %s32, 0
      %p71 = por %p69, %p70
      %s72 = ssub.s32 %s33, %s45
      %p73 = scmp.eq.s32.totalorder %s72, 0
      %s75 = sadd.s32 %s74, 1
      %s76 = scalar_select %p73, %s74, %s75
      %p79 = pneg %p73
      %p80 = scmp.eq.s32.totalorder %s26, 1
      %p81 = por %p79, %p80
      %p82 = scmp.ne.s32.totalorder %s74, %s77
      %p83 = scmp.eq.s32.totalorder %s26, 0
      %p84 = por %p82, %p83
      %p85 = scmp.ne.s32.totalorder %s74, %s77
      %p86 = scmp.eq.s32.totalorder %s31, 1
      %p87 = por %p85, %p86
      %p88 = scmp.ne.s32.totalorder %s77, %s78
      %p89 = scmp.eq.s32.totalorder %s31, 0
      %p90 = por %p88, %p89
      %p91 = scmp.ne.s32.totalorder %s77, %s78
      %p92 = scmp.eq.s32.totalorder %s32, 1
      %p93 = por %p91, %p92
      %p95 = scmp.ne.s32.totalorder %s78, %s94
      %p96 = scmp.eq.s32.totalorder %s32, 0
      %p97 = por %p95, %p96
      %s99 = sadd.s32 %s98, 1
      %p102 = scmp.eq.s32.totalorder %s26, 1
      %p103 = scmp.ne.s32.totalorder %s98, %s100
      %p104 = scmp.eq.s32.totalorder %s26, 0
      %p105 = por %p103, %p104
      %p106 = scmp.ne.s32.totalorder %s98, %s100
      %p107 = scmp.eq.s32.totalorder %s31, 1
      %p108 = por %p106, %p107
      %p109 = scmp.ne.s32.totalorder %s100, %s101
      %p110 = scmp.eq.s32.totalorder %s31, 0
      %p111 = por %p109, %p110
      %p112 = scmp.ne.s32.totalorder %s100, %s101
      %p113 = scmp.eq.s32.totalorder %s32, 1
      %p114 = por %p112, %p113
      %p116 = scmp.ne.s32.totalorder %s101, %s115
      %p117 = scmp.eq.s32.totalorder %s32, 0
      %p118 = por %p116, %p117
      %s120 = sadd.s32 %s119, 1
      %p123 = scmp.eq.s32.totalorder %s26, 1
      %p124 = scmp.ne.s32.totalorder %s119, %s121
      %p125 = scmp.eq.s32.totalorder %s26, 0
      %p126 = por %p124, %p125
      %p127 = scmp.ne.s32.totalorder %s119, %s121
      %p128 = scmp.eq.s32.totalorder %s31, 1
      %p129 = por %p127, %p128
      %p130 = scmp.ne.s32.totalorder %s121, %s122
      %p131 = scmp.eq.s32.totalorder %s31, 0
      %p132 = por %p130, %p131
      %p133 = scmp.ne.s32.totalorder %s121, %s122
      %p134 = scmp.eq.s32.totalorder %s32, 1
      %p135 = por %p133, %p134
      %p137 = scmp.ne.s32.totalorder %s122, %s136
      %p138 = scmp.eq.s32.totalorder %s32, 0
      %p139 = por %p137, %p138
      %s141 = sadd.s32 %s140, 1
      %p144 = scmp.eq.s32.totalorder %s26, 1
      %p145 = scmp.ne.s32.totalorder %s140, %s142
      %p146 = scmp.eq.s32.totalorder %s26, 0
      %p147 = por %p145, %p146
      %p148 = scmp.ne.s32.totalorder %s140, %s142
      %p149 = scmp.eq.s32.totalorder %s31, 1
      %p150 = por %p148, %p149
      %p151 = scmp.ne.s32.totalorder %s142, %s143
      %p152 = scmp.eq.s32.totalorder %s31, 0
      %p153 = por %p151, %p152
      %p154 = scmp.ne.s32.totalorder %s142, %s143
      %p155 = scmp.eq.s32.totalorder %s32, 1
      %p156 = por %p154, %p155
      %p158 = scmp.ne.s32.totalorder %s143, %s157
      %p159 = scmp.eq.s32.totalorder %s32, 0
      %p160 = por %p158, %p159
      %s162 = sadd.s32 %s161, 1
      %p165 = scmp.eq.s32.totalorder %s26, 1
      %p166 = scmp.ne.s32.totalorder %s161, %s163
      %p167 = scmp.eq.s32.totalorder %s26, 0
      %p168 = por %p166, %p167
      %p169 = scmp.ne.s32.totalorder %s161, %s163
      %p170 = scmp.eq.s32.totalorder %s31, 1
      %p171 = por %p169, %p170
      %p172 = scmp.ne.s32.totalorder %s163, %s164
      %p173 = scmp.eq.s32.totalorder %s31, 0
      %p174 = por %p172, %p173
      %p175 = scmp.ne.s32.totalorder %s163, %s164
      %p176 = scmp.eq.s32.totalorder %s32, 1
      %p177 = por %p175, %p176
      %p179 = scmp.ne.s32.totalorder %s164, %s178
      %p180 = scmp.eq.s32.totalorder %s32, 0
      %p181 = por %p179, %p180
      %s183 = sadd.s32 %s182, 1
      %p186 = scmp.eq.s32.totalorder %s26, 1
      %p187 = scmp.ne.s32.totalorder %s182, %s184
      %p188 = scmp.eq.s32.totalorder %s26, 0
      %p189 = por %p187, %p188
      %p190 = scmp.ne.s32.totalorder %s182, %s184
      %p191 = scmp.eq.s32.totalorder %s31, 1
      %p192 = por %p190, %p191
      %p193 = scmp.ne.s32.totalorder %s184, %s185
      %p194 = scmp.eq.s32.totalorder %s31, 0
      %p195 = por %p193, %p194
      %p196 = scmp.ne.s32.totalorder %s184, %s185
      %p197 = scmp.eq.s32.totalorder %s32, 1
      %p198 = por %p196, %p197
      %p200 = scmp.ne.s32.totalorder %s185, %s199
      %p201 = scmp.eq.s32.totalorder %s32, 0
      %p202 = por %p200, %p201
      %s204 = sadd.s32 %s203, 1
      %p207 = scmp.eq.s32.totalorder %s26, 1
      %p208 = scmp.ne.s32.totalorder %s203, %s205
      %p209 = scmp.eq.s32.totalorder %s26, 0
      %p210 = por %p208, %p209
      %p211 = scmp.ne.s32.totalorder %s203, %s205
      %p212 = scmp.eq.s32.totalorder %s31, 1
      %p213 = por %p211, %p212
      %p214 = scmp.ne.s32.totalorder %s205, %s206
      %p215 = scmp.eq.s32.totalorder %s31, 0
      %p216 = por %p214, %p215
      %p217 = scmp.ne.s32.totalorder %s205, %s206
      %p218 = scmp.eq.s32.totalorder %s32, 1
      %p219 = por %p217, %p218
      %p221 = scmp.ne.s32.totalorder %s206, %s220
      %p222 = scmp.eq.s32.totalorder %s32, 0
      %p223 = por %p221, %p222
      %s225 = sadd.s32 %s224, 1
      %p228 = scmp.eq.s32.totalorder %s26, 1
      %p229 = scmp.ne.s32.totalorder %s224, %s226
      %p230 = scmp.eq.s32.totalorder %s26, 0
      %p231 = por %p229, %p230
      %p232 = scmp.ne.s32.totalorder %s224, %s226
      %p233 = scmp.eq.s32.totalorder %s31, 1
      %p234 = por %p232, %p233
      %p235 = scmp.ne.s32.totalorder %s226, %s227
      %p236 = scmp.eq.s32.totalorder %s31, 0
      %p237 = por %p235, %p236
      %p238 = scmp.ne.s32.totalorder %s226, %s227
      %p239 = scmp.eq.s32.totalorder %s32, 1
      %p240 = por %p238, %p239
      %p242 = scmp.ne.s32.totalorder %s227, %s241
      %p243 = scmp.eq.s32.totalorder %s32, 0
      %p244 = por %p242, %p243
      %s246 = sadd.s32 %s245, 1
      %p249 = scmp.eq.s32.totalorder %s26, 1
      %p250 = scmp.ne.s32.totalorder %s245, %s247
      %p251 = scmp.eq.s32.totalorder %s26, 0
      %p252 = por %p250, %p251
      %p253 = scmp.ne.s32.totalorder %s245, %s247
      %p254 = scmp.eq.s32.totalorder %s31, 1
      %p255 = por %p253, %p254
      %p256 = scmp.ne.s32.totalorder %s247, %s248
      %p257 = scmp.eq.s32.totalorder %s31, 0
      %p258 = por %p256, %p257
      %p259 = scmp.ne.s32.totalorder %s247, %s248
      %p260 = scmp.eq.s32.totalorder %s32, 1
      %p261 = por %p259, %p260
      %p263 = scmp.ne.s32.totalorder %s248, %s262
      %p264 = scmp.eq.s32.totalorder %s32, 0
      %p265 = por %p263, %p264
      %s266 = ssub.s32 %s33, %s45
      %s267 = ssub.s32 %s34, %s41
      %s268 = sor.u32 %s266, %s267
      %p269 = scmp.eq.s32.totalorder %s268, 0
      %s271 = sadd.s32 %s270, 1
      %s272 = scalar_select %p269, %s270, %s271
      %p275 = pneg %p269
      %p276 = scmp.eq.s32.totalorder %s26, 1
      %p277 = por %p275, %p276
      %p278 = scmp.ne.s32.totalorder %s270, %s273
      %p279 = scmp.eq.s32.totalorder %s26, 0
      %p280 = por %p278, %p279
      %p281 = scmp.ne.s32.totalorder %s270, %s273
      %p282 = scmp.eq.s32.totalorder %s31, 1
      %p283 = por %p281, %p282
      %p284 = scmp.ne.s32.totalorder %s273, %s274
      %p285 = scmp.eq.s32.totalorder %s31, 0
      %p286 = por %p284, %p285
      %p287 = scmp.ne.s32.totalorder %s273, %s274
      %p288 = scmp.eq.s32.totalorder %s32, 1
      %p289 = por %p287, %p288
      %p291 = scmp.ne.s32.totalorder %s274, %s290
      %p292 = scmp.eq.s32.totalorder %s32, 0
      %p293 = por %p291, %p292
      %p294 = scmp.le.s32.totalorder 1, %s26
      %p295 = scmp.lt.s32.totalorder %s26, 3
      %p296 = pnand %p294, %p295
      %p297 = pneg %p296
      // Predicated region
      $region9: #{tpu_custom_call.1} parent=5 // pred_check
        _
      $region10: #{tpu_custom_call.1} parent=5 // pred_check_branch
        %299 = sbr.rel (%p296) target = $region12
      $region11: #{tpu_custom_call.1} parent=5 // pred_region
        %s300 = ssub.s32 %s26, 1
        // Predicated region
        $region13: #{tpu_custom_call.1} parent=11 // pred_check
          %p301 = pneg %p111
        $region14: #{tpu_custom_call.1} parent=11 // pred_check_branch
          %303 = sbr.rel (%p301) target = $region16
        $region15: #{tpu_custom_call.1} parent=11 // pred_region
          %s305 = ssub.s32 256, 256
          %306 = vsyncadd [#allocation9], %s305
          %s307 = sshll.u32 [#allocation10], 4
          %s308 = int_to_ptr.vmem [resolvable:$true] %s307
          %313 = dma.hbm_to_vmem [thread:$0]  %s2, 256, %s308, [#allocation9], 64, 64, 4
        $region16: #{tpu_custom_call.1} parent=11 // pred_fallthru
          _
        // Predicated region
        $region17: #{tpu_custom_call.1} parent=11 // pred_check
          %p314 = pneg %p132
        $region18: #{tpu_custom_call.1} parent=11 // pred_check_branch
          %316 = sbr.rel (%p314) target = $region20
        $region19: #{tpu_custom_call.1} parent=11 // pred_region
          _
        $region20: #{tpu_custom_call.1} parent=11 // pred_fallthru
          _
        // Predicated region
        $region21: #{tpu_custom_call.1} parent=11 // pred_check
          %p317 = pneg %p153
        $region22: #{tpu_custom_call.1} parent=11 // pred_check_branch
          %319 = sbr.rel (%p317) target = $region24
        $region23: #{tpu_custom_call.1} parent=11 // pred_region
          %s321 = ssub.s32 256, 256
          %322 = vsyncadd [#allocation12], %s321
          %s323 = sshll.u32 [#allocation11], 4
          %s324 = int_to_ptr.vmem [resolvable:$true] %s323
          %329 = dma.hbm_to_vmem [thread:$0]  %s4, 256, %s324, [#allocation12], 64, 64, 4
        $region24: #{tpu_custom_call.1} parent=11 // pred_fallthru
          _
        // Predicated region
        $region25: #{tpu_custom_call.1} parent=11 // pred_check
          %p330 = pneg %p174
        $region26: #{tpu_custom_call.1} parent=11 // pred_check_branch
          %332 = sbr.rel (%p330) target = $region28
        $region27: #{tpu_custom_call.1} parent=11 // pred_region
          _
        $region28: #{tpu_custom_call.1} parent=11 // pred_fallthru
          _
        // Predicated region
        $region29: #{tpu_custom_call.1} parent=11 // pred_check
          %p333 = pneg %p195
        $region30: #{tpu_custom_call.1} parent=11 // pred_check_branch
          %335 = sbr.rel (%p333) target = $region32
        $region31: #{tpu_custom_call.1} parent=11 // pred_region
          %s337 = ssub.s32 256, 256
          %338 = vsyncadd [#allocation12], %s337
          %s339 = sshll.u32 [#allocation13], 4
          %s340 = int_to_ptr.vmem [resolvable:$true] %s339
          %345 = dma.hbm_to_vmem [thread:$0]  %s6, 256, %s340, [#allocation12], 64, 64, 4
        $region32: #{tpu_custom_call.1} parent=11 // pred_fallthru
          _
        // Predicated region
        $region33: #{tpu_custom_call.1} parent=11 // pred_check
          %p346 = pneg %p216
        $region34: #{tpu_custom_call.1} parent=11 // pred_check_branch
          %348 = sbr.rel (%p346) target = $region36
        $region35: #{tpu_custom_call.1} parent=11 // pred_region
          _
        $region36: #{tpu_custom_call.1} parent=11 // pred_fallthru
          _
        // Predicated region
        $region37: #{tpu_custom_call.1} parent=11 // pred_check
          %p349 = pneg %p237
        $region38: #{tpu_custom_call.1} parent=11 // pred_check_branch
          %351 = sbr.rel (%p349) target = $region40
        $region39: #{tpu_custom_call.1} parent=11 // pred_region
          _
        $region40: #{tpu_custom_call.1} parent=11 // pred_fallthru
          _
        // Predicated region
        $region41: #{tpu_custom_call.1} parent=11 // pred_check
          %p352 = pneg %p258
        $region42: #{tpu_custom_call.1} parent=11 // pred_check_branch
          %354 = sbr.rel (%p352) target = $region44
        $region43: #{tpu_custom_call.1} parent=11 // pred_region
          _
        $region44: #{tpu_custom_call.1} parent=11 // pred_fallthru
          _
      $region12: #{tpu_custom_call.1} parent=5 // pred_fallthru
        _
      %p355 = scmp.lt.s32.totalorder %s26, 2
      // Predicated region
      $region45: #{tpu_custom_call.1} parent=5 // pred_check
        %p356 = pneg %p355
      $region46: #{tpu_custom_call.1} parent=5 // pred_check_branch
        %358 = sbr.rel (%p356) target = $region48
      $region47: #{tpu_custom_call.1} parent=5 // pred_region
        // Predicated region
        $region49: #{tpu_custom_call.1} parent=47 // pred_check
          %p359 = pneg %p58
        $region50: #{tpu_custom_call.1} parent=47 // pred_check_branch
          %361 = sbr.rel (%p359) target = $region52
        $region51: #{tpu_custom_call.1} parent=47 // pred_region
          %s362 = sand.u32 %s48, 1
          %s363 = scalar_lea.sflag [#allocation6], %s362
          %s364 = sand.u32 %s48, 1
          %s365 = smul.addr %s364, 8
          %s366 = scalar_lea.vmem [#allocation5], %s365
          %s368 = ssub.s32 128, 128
          %369 = vsyncadd %s363, %s368
          %s370 = smul.addr %s33, 128
          %s371 = scalar_lea.hbm %s0, %s370
          %s373 = sshll.u32 %s366, 4
          %s374 = int_to_ptr.vmem [resolvable:$true] %s373
          %376 = dma.hbm_to_vmem [thread:$0]  %s371, 128, %s374, %s363
        $region52: #{tpu_custom_call.1} parent=47 // pred_fallthru
          _
        // Predicated region
        $region53: #{tpu_custom_call.1} parent=47 // pred_check
          %p377 = pneg %p84
        $region54: #{tpu_custom_call.1} parent=47 // pred_check_branch
          %379 = sbr.rel (%p377) target = $region56
        $region55: #{tpu_custom_call.1} parent=47 // pred_region
          %s380 = sand.u32 %s26, 1
          %s381 = scalar_lea.sflag [#allocation9], %s380
          %s382 = sand.u32 %s74, 1
          %s383 = scalar_lea.vmem [#allocation8], %s382
          %s385 = ssub.s32 16, 16
          %386 = vsyncadd %s381, %s385
          %s387 = smul.addr %s33, 16
          %s388 = scalar_lea.hbm %s1, %s387
          %s390 = sshll.u32 %s383, 4
          %s391 = int_to_ptr.vmem [resolvable:$true] %s390
          %393 = dma.hbm_to_vmem [thread:$0]  %s388, 16, %s391, %s381
        $region56: #{tpu_custom_call.1} parent=47 // pred_fallthru
          _
      $region48: #{tpu_custom_call.1} parent=5 // pred_fallthru
        _
      %p394 = scmp.le.s32.totalorder 1, %s26
      %p395 = scmp.lt.s32.totalorder %s26, 3
      %p396 = pnand %p394, %p395
      %p397 = pneg %p396
      // Predicated region
      $region57: #{tpu_custom_call.1} parent=5 // pred_check
        _
      $region58: #{tpu_custom_call.1} parent=5 // pred_check_branch
        %399 = sbr.rel (%p396) target = $region60
      $region59: #{tpu_custom_call.1} parent=5 // pred_region
        %s400 = ssub.s32 %s26, 1
        %s401 = sand.u32 %s51, 1
        %s402 = scalar_lea.sflag [#allocation6], %s401
        %s403 = sand.u32 %s51, 1
        %s404 = smul.addr %s403, 8
        %s405 = scalar_lea.vmem [#allocation5], %s404
        // Predicated region
        $region61: #{tpu_custom_call.1} parent=59 // pred_check
          %p406 = pneg %p64
        $region62: #{tpu_custom_call.1} parent=59 // pred_check_branch
          %408 = sbr.rel (%p406) target = $region64
        $region63: #{tpu_custom_call.1} parent=59 // pred_region
          %409 = dma.done %s402, 128
        $region64: #{tpu_custom_call.1} parent=59 // pred_fallthru
          _
        %s410 = sand.u32 %s31, 1
        %s411 = scalar_lea.sflag [#allocation9], %s410
        %s412 = sand.u32 %s77, 1
        %s413 = scalar_lea.vmem [#allocation8], %s412
        // Predicated region
        $region65: #{tpu_custom_call.1} parent=59 // pred_check
          %p414 = pneg %p90
        $region66: #{tpu_custom_call.1} parent=59 // pred_check_branch
          %416 = sbr.rel (%p414) target = $region68
        $region67: #{tpu_custom_call.1} parent=59 // pred_region
          %417 = dma.done %s411, 16
        $region68: #{tpu_custom_call.1} parent=59 // pred_fallthru
          _
        // Predicated region
        $region69: #{tpu_custom_call.1} parent=59 // pred_check
          %p418 = pneg %p111
        $region70: #{tpu_custom_call.1} parent=59 // pred_check_branch
          %420 = sbr.rel (%p418) target = $region72
        $region71: #{tpu_custom_call.1} parent=59 // pred_region
          %421 = dma.done [#allocation9], 256
        $region72: #{tpu_custom_call.1} parent=59 // pred_fallthru
          _
        // Predicated region
        $region73: #{tpu_custom_call.1} parent=59 // pred_check
          %p422 = pneg %p153
        $region74: #{tpu_custom_call.1} parent=59 // pred_check_branch
          %424 = sbr.rel (%p422) target = $region76
        $region75: #{tpu_custom_call.1} parent=59 // pred_region
          %425 = dma.done [#allocation12], 256
        $region76: #{tpu_custom_call.1} parent=59 // pred_fallthru
          _
        // Predicated region
        $region77: #{tpu_custom_call.1} parent=59 // pred_check
          %p426 = pneg %p195
        $region78: #{tpu_custom_call.1} parent=59 // pred_check_branch
          %428 = sbr.rel (%p426) target = $region80
        $region79: #{tpu_custom_call.1} parent=59 // pred_region
          %429 = dma.done [#allocation12], 256
        $region80: #{tpu_custom_call.1} parent=59 // pred_fallthru
          _
        %s430 = sand.u32 %s51, 1
        %s431 = scalar_lea.sflag [#allocation6], %s430
        %s432 = sand.u32 %s51, 1
        %s433 = smul.addr %s432, 8
        %s434 = scalar_lea.vmem [#allocation5], %s433
        %p435 = pneg %p64
        %p436 = pneg %p61
        %s437 = sand.u32 %s31, 1
        %s438 = scalar_lea.sflag [#allocation9], %s437
        %s439 = sand.u32 %s77, 1
        %s440 = scalar_lea.vmem [#allocation8], %s439
        %p441 = pneg %p90
        %p442 = pneg %p87
        %p443 = pneg %p111
        %p444 = pneg %p108
        %p445 = pneg %p132
        %p446 = pneg %p129
        %p447 = pneg %p153
        %p448 = pneg %p150
        %p449 = pneg %p174
        %p450 = pneg %p171
        %p451 = pneg %p195
        %p452 = pneg %p192
        %p453 = pneg %p216
        %p454 = pneg %p213
        %p455 = pneg %p237
        %p456 = pneg %p234
        %p457 = pneg %p258
        %p458 = pneg %p255
        %p459 = pneg %p286
        %p460 = pneg %p283
        %s461 = sand.u32 %s273, 1
        %s462 = scalar_lea.sflag [#allocation7], %s461
        %s463 = sand.u32 %s273, 1
        %s464 = smul.addr %s463, 8
        %s465 = scalar_lea.vmem [#allocation14], %s464
        %s467 = smul.u32 %s36, 8
        %p468 = scmp.eq.s32.totalorder %s36, 0
        // Predicated region
        $region81: #{tpu_custom_call.1} parent=59 // pred_check
          %p469 = pneg %p468
        $region82: #{tpu_custom_call.1} parent=59 // pred_check_branch
          %471 = sbr.rel (%p469) target = $region84
        $region83: #{tpu_custom_call.1} parent=59 // pred_region
          %v472 = vld [vmem:[%s405] sm:$0xff]
          %v473 = vpack.c.bf16 %v472, %v472
          %v474 = vld [vmem:[#allocation11] sm:$0xf]
          %v475 = vld [vmem:[#allocation11 + $0x4] sm:$0xf]
          %v476 = vld [vmem:[#allocation11 + $0x8] sm:$0xf]
          %v477 = vld [vmem:[#allocation11 + $0xc] sm:$0xf]
          %v478 = vld [vmem:[%s5] sm:$0x1]
          %v480 = vlaneseq
          %v481 = vshrl.u32 %v480, 7
          %v482 = vsub.s32 0, %v481
          %v483 = vrot.slane %v478, %v482
          %v489 = vunpack.c.l.b16 %v474
          %v490 = vunpack.c.l.b16 %v475
          %v491 = vunpack.c.l.b16 %v476
          %v492 = vunpack.c.l.b16 %v477
          %v493 = vpack.c.b16 %v490, %v489
          %v494 = vpack.c.b16 %v492, %v491
          %vm497 = vcmask 261120
          %v499 = vsel %vm497, %v473, 0
          %501 = vmatprep.subr.bf16.mxu0 0
          %502 = vmatpush1.bf16.msra.mxu0 0
          %503 = vmatprep.subr.bf16.mxu0 0
          %504 = vmatpush1.bf16.msra.mxu0 0
          %505 = vmatprep.subr.bf16.mxu0 0
          %506 = vmatpush1.bf16.msra.mxu0 0
          %507 = vmatprep.subr.bf16.mxu0 0
          %508 = vmatpush1.bf16.msra.mxu0 0
          %509 = vmatprep.subr.bf16.mxu0 0
          %510 = vmatpush1.bf16.msra.mxu0 0
          %511 = vmatprep.subr.bf16.mxu0 0
          %512 = vmatpush1.bf16.msra.mxu0 0
          %513 = vmatprep.subr.bf16.mxu0 0
          %514 = vmatpush1.bf16.msra.mxu0 %v494
          %515 = vmatprep.subr.bf16.mxu0 0
          %516 = vmatpush1.bf16.msra.mxu0 %v493
          %517 = vmatprep.subr.bf16.mxu0 0
          %518 = vmatpush2.bf16.msra.mxu0 0
          %519 = vmatprep.subr.bf16.mxu0 0
          %520 = vmatpush2.bf16.msra.mxu0 0
          %521 = vmatprep.subr.bf16.mxu0 0
          %522 = vmatpush2.bf16.msra.mxu0 0
          %523 = vmatprep.subr.bf16.mxu0 0
          %524 = vmatpush2.bf16.msra.mxu0 0
          %525 = vmatprep.subr.bf16.mxu0 0
          %526 = vmatpush2.bf16.msra.mxu0 0
          %527 = vmatprep.subr.bf16.mxu0 0
          %528 = vmatpush2.bf16.msra.mxu0 0
          %529 = vmatprep.subr.bf16.mxu0 0
          %530 = vmatpush2.bf16.msra.mxu0 0
          %531 = vmatprep.subr.bf16.mxu0 0
          %532 = vmatpush2.bf16.msra.mxu0 0
          %533 = vmatprep.mubr.bf16.mxu0 0
          %534 = vmatmul.mubr.bf16.gmra.mxu0 %v499
          %v535 = vpop.f32.mrf.mxu0
          %v536 = vadd.f32 %v483, %v535
          %v537 = vpop.f32.mrf.mxu0
          %v538 = vpop.f32.mrf.mxu0
          %v539 = vpop.f32.mrf.mxu0
          %540 = vdwg.mxu0
          %v541 = vld [vmem:[#allocation13] sm:$0xf]
          %v542 = vld [vmem:[#allocation13 + $0x4] sm:$0xf]
          %v543 = vld [vmem:[#allocation13 + $0x8] sm:$0xf]
          %v544 = vld [vmem:[#allocation13 + $0xc] sm:$0xf]
          %v545 = vld [vmem:[%s7] sm:$0x1]
          %v547 = vlaneseq
          %v548 = vshrl.u32 %v547, 7
          %v549 = vsub.s32 0, %v548
          %v550 = vrot.slane %v545, %v549
          %v556 = vunpack.c.l.b16 %v541
          %v557 = vunpack.c.l.b16 %v542
          %v558 = vunpack.c.l.b16 %v543
          %v559 = vunpack.c.l.b16 %v544
          %v560 = vpack.c.b16 %v557, %v556
          %v561 = vpack.c.b16 %v559, %v558
          %564 = vmatprep.subr.bf16.mxu0 0
          %565 = vmatpush1.bf16.msra.mxu0 0
          %566 = vmatprep.subr.bf16.mxu0 0
          %567 = vmatpush1.bf16.msra.mxu0 0
          %568 = vmatprep.subr.bf16.mxu0 0
          %569 = vmatpush1.bf16.msra.mxu0 0
          %570 = vmatprep.subr.bf16.mxu0 0
          %571 = vmatpush1.bf16.msra.mxu0 0
          %572 = vmatprep.subr.bf16.mxu0 0
          %573 = vmatpush1.bf16.msra.mxu0 0
          %574 = vmatprep.subr.bf16.mxu0 0
          %575 = vmatpush1.bf16.msra.mxu0 0
          %576 = vmatprep.subr.bf16.mxu0 0
          %577 = vmatpush1.bf16.msra.mxu0 %v561
          %578 = vmatprep.subr.bf16.mxu0 0
          %579 = vmatpush1.bf16.msra.mxu0 %v560
          %580 = vmatprep.subr.bf16.mxu0 0
          %581 = vmatpush2.bf16.msra.mxu0 0
          %582 = vmatprep.subr.bf16.mxu0 0
          %583 = vmatpush2.bf16.msra.mxu0 0
          %584 = vmatprep.subr.bf16.mxu0 0
          %585 = vmatpush2.bf16.msra.mxu0 0
          %586 = vmatprep.subr.bf16.mxu0 0
          %587 = vmatpush2.bf16.msra.mxu0 0
          %588 = vmatprep.subr.bf16.mxu0 0
          %589 = vmatpush2.bf16.msra.mxu0 0
          %590 = vmatprep.subr.bf16.mxu0 0
          %591 = vmatpush2.bf16.msra.mxu0 0
          %592 = vmatprep.subr.bf16.mxu0 0
          %593 = vmatpush2.bf16.msra.mxu0 0
          %594 = vmatprep.subr.bf16.mxu0 0
          %595 = vmatpush2.bf16.msra.mxu0 0
          %596 = vmatprep.mubr.bf16.mxu0 0
          %597 = vmatmul.mubr.bf16.gmra.mxu0 %v499
          %v598 = vpop.f32.mrf.mxu0
          %v599 = vadd.f32 %v550, %v598
          %v600 = vpop.f32.mrf.mxu0
          %v601 = vpop.f32.mrf.mxu0
          %v602 = vpop.f32.mrf.mxu0
          %603 = vdwg.mxu0
          %v604 = vpack.c.bf16 %v536, %v536
          %vm605 = vcmask 257024
          %606 = vst.msk [vmem:[#allocation2] sm:$0xf] %vm605, %v604
          %v607 = vpack.c.bf16 %v599, %v599
          %608 = vst.msk [vmem:[#allocation3] sm:$0xf] %vm605, %v607
        $region84: #{tpu_custom_call.1} parent=59 // pred_fallthru
          _
        %s609 = scalar_lea.vmem %s405, %s467 [#allocation5]
        %v610 = vld [vmem:[%s609] sm:$0xff]
        %v611 = vpack.c.bf16 %v610, %v610
        %v612 = vld [vmem:[#allocation10] sm:$0xf]
        %v613 = vld [vmem:[#allocation10 + $0x4] sm:$0xf]
        %v614 = vld [vmem:[#allocation10 + $0x8] sm:$0xf]
        %v615 = vld [vmem:[#allocation10 + $0xc] sm:$0xf]
        %v616 = vld [vmem:[%s3] sm:$0x1]
        %v618 = vlaneseq
        %v619 = vshrl.u32 %v618, 7
        %v620 = vsub.s32 0, %v619
        %v621 = vrot.slane %v616, %v620
        %v627 = vunpack.c.l.b16 %v612
        %v628 = vunpack.c.l.b16 %v613
        %v629 = vunpack.c.l.b16 %v614
        %v630 = vunpack.c.l.b16 %v615
        %v631 = vpack.c.b16 %v628, %v627
        %v632 = vpack.c.b16 %v630, %v629
        %vm635 = vcmask 261120
        %v637 = vsel %vm635, %v611, 0
        %639 = vmatprep.subr.bf16.mxu0 0
        %640 = vmatpush1.bf16.msra.mxu0 0
        %641 = vmatprep.subr.bf16.mxu0 0
        %642 = vmatpush1.bf16.msra.mxu0 0
        %643 = vmatprep.subr.bf16.mxu0 0
        %644 = vmatpush1.bf16.msra.mxu0 0
        %645 = vmatprep.subr.bf16.mxu0 0
        %646 = vmatpush1.bf16.msra.mxu0 0
        %647 = vmatprep.subr.bf16.mxu0 0
        %648 = vmatpush1.bf16.msra.mxu0 0
        %649 = vmatprep.subr.bf16.mxu0 0
        %650 = vmatpush1.bf16.msra.mxu0 0
        %651 = vmatprep.subr.bf16.mxu0 0
        %652 = vmatpush1.bf16.msra.mxu0 %v632
        %653 = vmatprep.subr.bf16.mxu0 0
        %654 = vmatpush1.bf16.msra.mxu0 %v631
        %655 = vmatprep.subr.bf16.mxu0 0
        %656 = vmatpush2.bf16.msra.mxu0 0
        %657 = vmatprep.subr.bf16.mxu0 0
        %658 = vmatpush2.bf16.msra.mxu0 0
        %659 = vmatprep.subr.bf16.mxu0 0
        %660 = vmatpush2.bf16.msra.mxu0 0
        %661 = vmatprep.subr.bf16.mxu0 0
        %662 = vmatpush2.bf16.msra.mxu0 0
        %663 = vmatprep.subr.bf16.mxu0 0
        %664 = vmatpush2.bf16.msra.mxu0 0
        %665 = vmatprep.subr.bf16.mxu0 0
        %666 = vmatpush2.bf16.msra.mxu0 0
        %667 = vmatprep.subr.bf16.mxu0 0
        %668 = vmatpush2.bf16.msra.mxu0 0
        %669 = vmatprep.subr.bf16.mxu0 0
        %670 = vmatpush2.bf16.msra.mxu0 0
        %671 = vmatprep.mubr.bf16.mxu0 0
        %672 = vmatmul.mubr.bf16.gmra.mxu0 %v637
        %v673 = vpop.f32.mrf.mxu0
        %v674 = vadd.f32 %v621, %v673
        %v675 = vpop.f32.mrf.mxu0
        %v676 = vpop.f32.mrf.mxu0
        %v677 = vpop.f32.mrf.mxu0
        %678 = vdwg.mxu0
        %v679 = vmul.f32 %v674, 0.35355338
        %v680 = vpack.c.bf16 %v679, %v679
        %v681 = vlaneseq
        %v682 = vshrl.u32 %v681, 7
        %v683 = vstv %s467
        %v684 = vadd.s32 %v682, %v683
        %v685 = vlaneseq
        %v686 = vand.u32 %v685, 127
        %vm687 = vcmp.gt.s32.totalorder %v686, %v684
        %v688 = vsel %vm687, -1e+30, 0.0
        %v689 = vld [vmem:[%s413] sm:$0x1]
        %v690 = vmul.f32 %v689, 0.35355338
        %v692 = vlaneseq
        %v693 = vshrl.u32 %v692, 7
        %v694 = vsub.s32 0, %v693
        %v695 = vrot.slane %v690, %v694
        %v697 = vadd.f32 %v688, %v695
        %v698 = vld [vmem:[#allocation2] sm:$0xf]
        %v699 = vld [vmem:[#allocation3] sm:$0xf]
        %vm700 = vcmask 64512
        %v702 = vsel %vm700, %v680, 0
        %v705 = vsel %vm700, %v698, 0
        %707 = vmatprep.subr.bf16.mxu0 0
        %708 = vmatpush1.bf16.xpose.msra.mxu0 0
        %709 = vmatprep.subr.bf16.mxu0 0
        %710 = vmatpush1.bf16.xpose.msra.mxu0 0
        %711 = vmatprep.subr.bf16.mxu0 0
        %712 = vmatpush1.bf16.xpose.msra.mxu0 0
        %713 = vmatprep.subr.bf16.mxu0 0
        %714 = vmatpush1.bf16.xpose.msra.mxu0 0
        %715 = vmatprep.subr.bf16.mxu0 0
        %716 = vmatpush1.bf16.xpose.msra.mxu0 0
        %717 = vmatprep.subr.bf16.mxu0 0
        %718 = vmatpush1.bf16.xpose.msra.mxu0 0
        %719 = vmatprep.subr.bf16.mxu0 0
        %720 = vmatpush1.bf16.xpose.msra.mxu0 0
        %721 = vmatprep.subr.bf16.mxu0 0
        %722 = vmatpush1.bf16.xpose.msra.mxu0 %v705
        %723 = vmatprep.subr.bf16.mxu0 0
        %724 = vmatpush2.bf16.xpose.msra.mxu0 0
        %725 = vmatprep.subr.bf16.mxu0 0
        %726 = vmatpush2.bf16.xpose.msra.mxu0 0
        %727 = vmatprep.subr.bf16.mxu0 0
        %728 = vmatpush2.bf16.xpose.msra.mxu0 0
        %729 = vmatprep.subr.bf16.mxu0 0
        %730 = vmatpush2.bf16.xpose.msra.mxu0 0
        %731 = vmatprep.subr.bf16.mxu0 0
        %732 = vmatpush2.bf16.xpose.msra.mxu0 0
        %733 = vmatprep.subr.bf16.mxu0 0
        %734 = vmatpush2.bf16.xpose.msra.mxu0 0
        %735 = vmatprep.subr.bf16.mxu0 0
        %736 = vmatpush2.bf16.xpose.msra.mxu0 0
        %737 = vmatprep.subr.bf16.mxu0 0
        %738 = vmatpush2.bf16.xpose.msra.mxu0 0
        %739 = vmatprep.mubr.bf16.mxu0 0
        %740 = vmatmul.mubr.bf16.gmra.mxu0 %v702
        %v741 = vpop.f32.mrf.mxu0
        %v742 = vadd.f32 %v697, %v741
        %v743 = vpop.f32.mrf.mxu0
        %v744 = vpop.f32.mrf.mxu0
        %v745 = vpop.f32.mrf.mxu0
        %746 = vdwg.mxu0
        %v747 = vsel %vm700, %v742, -inf
        %748 = vmax.xlane.f32.xlu0 %v747
        %v749 = vpop.xlane.xlu0 %748
        %v750 = vsub.f32 %v742, %v749
        %v751 = vmul.f32 %v750, 1.442695
        %v752 = vpow.pop %v751
        %v753 = vsel %vm700, %v752, 0.0
        %754 = vadd.xlane.f32.xlu0 %v753
        %v755 = vpop.xlane.xlu0 %754
        %v756 = vrcp.pop %v755
        %v757 = vmul.f32 %v752, %v756
        %v758 = vpack.c.bf16 %v757, %v757
        %v760 = vsel %vm700, %v758, 0
        %vm762 = vcmask 1043456
        %v764 = vsel %vm762, %v699, 0
        %766 = vmatprep.subr.bf16.mxu0 0
        %767 = vmatpush1.bf16.msra.mxu0 0
        %768 = vmatprep.subr.bf16.mxu0 0
        %769 = vmatpush1.bf16.msra.mxu0 0
        %770 = vmatprep.subr.bf16.mxu0 0
        %771 = vmatpush1.bf16.msra.mxu0 0
        %772 = vmatprep.subr.bf16.mxu0 0
        %773 = vmatpush1.bf16.msra.mxu0 0
        %774 = vmatprep.subr.bf16.mxu0 0
        %775 = vmatpush1.bf16.msra.mxu0 0
        %776 = vmatprep.subr.bf16.mxu0 0
        %777 = vmatpush1.bf16.msra.mxu0 0
        %778 = vmatprep.subr.bf16.mxu0 0
        %779 = vmatpush1.bf16.msra.mxu0 0
        %780 = vmatprep.subr.bf16.mxu0 0
        %781 = vmatpush1.bf16.msra.mxu0 %v764
        %782 = vmatprep.subr.bf16.mxu0 0
        %783 = vmatpush2.bf16.msra.mxu0 0
        %784 = vmatprep.subr.bf16.mxu0 0
        %785 = vmatpush2.bf16.msra.mxu0 0
        %786 = vmatprep.subr.bf16.mxu0 0
        %787 = vmatpush2.bf16.msra.mxu0 0
        %788 = vmatprep.subr.bf16.mxu0 0
        %789 = vmatpush2.bf16.msra.mxu0 0
        %790 = vmatprep.subr.bf16.mxu0 0
        %791 = vmatpush2.bf16.msra.mxu0 0
        %792 = vmatprep.subr.bf16.mxu0 0
        %793 = vmatpush2.bf16.msra.mxu0 0
        %794 = vmatprep.subr.bf16.mxu0 0
        %795 = vmatpush2.bf16.msra.mxu0 0
        %796 = vmatprep.subr.bf16.mxu0 0
        %797 = vmatpush2.bf16.msra.mxu0 0
        %798 = vmatprep.mubr.bf16.mxu0 0
        %799 = vmatmul.mubr.bf16.gmra.mxu0 %v760
        %v800 = vpop.f32.mrf.mxu0
        %v801 = vadd.f32 0.0, %v800
        %v802 = vpop.f32.mrf.mxu0
        %v803 = vpop.f32.mrf.mxu0
        %v804 = vpop.f32.mrf.mxu0
        %805 = vdwg.mxu0
        %806 = vst.msk [vmem:[#allocation4] sm:$0xff] %vm700, %v801
        %v807 = vld [vmem:[#allocation2] sm:$0xf]
        %v808 = vld [vmem:[#allocation3] sm:$0xf]
        %810 = vrot.lane.b32.xlu0 %v680, 120
        %v811 = vpop.permute.xlu0 %810
        %v813 = vunpack.c.l.b16 %v807
        %v814 = vpack.c.b16 %v813, %v813
        %815 = vrot.lane.b32.xlu0 %v814, 120
        %v816 = vpop.permute.xlu0 %815
        %v818 = vsel %vm700, %v811, 0
        %v821 = vsel %vm700, %v816, 0
        %823 = vmatprep.subr.bf16.mxu0 0
        %824 = vmatpush1.bf16.xpose.msra.mxu0 0
        %825 = vmatprep.subr.bf16.mxu0 0
        %826 = vmatpush1.bf16.xpose.msra.mxu0 0
        %827 = vmatprep.subr.bf16.mxu0 0
        %828 = vmatpush1.bf16.xpose.msra.mxu0 0
        %829 = vmatprep.subr.bf16.mxu0 0
        %830 = vmatpush1.bf16.xpose.msra.mxu0 0
        %831 = vmatprep.subr.bf16.mxu0 0
        %832 = vmatpush1.bf16.xpose.msra.mxu0 0
        %833 = vmatprep.subr.bf16.mxu0 0
        %834 = vmatpush1.bf16.xpose.msra.mxu0 0
        %835 = vmatprep.subr.bf16.mxu0 0
        %836 = vmatpush1.bf16.xpose.msra.mxu0 0
        %837 = vmatprep.subr.bf16.mxu0 0
        %838 = vmatpush1.bf16.xpose.msra.mxu0 %v821
        %839 = vmatprep.subr.bf16.mxu0 0
        %840 = vmatpush2.bf16.xpose.msra.mxu0 0
        %841 = vmatprep.subr.bf16.mxu0 0
        %842 = vmatpush2.bf16.xpose.msra.mxu0 0
        %843 = vmatprep.subr.bf16.mxu0 0
        %844 = vmatpush2.bf16.xpose.msra.mxu0 0
        %845 = vmatprep.subr.bf16.mxu0 0
        %846 = vmatpush2.bf16.xpose.msra.mxu0 0
        %847 = vmatprep.subr.bf16.mxu0 0
        %848 = vmatpush2.bf16.xpose.msra.mxu0 0
        %849 = vmatprep.subr.bf16.mxu0 0
        %850 = vmatpush2.bf16.xpose.msra.mxu0 0
        %851 = vmatprep.subr.bf16.mxu0 0
        %852 = vmatpush2.bf16.xpose.msra.mxu0 0
        %853 = vmatprep.subr.bf16.mxu0 0
        %854 = vmatpush2.bf16.xpose.msra.mxu0 0
        %855 = vmatprep.mubr.bf16.mxu0 0
        %856 = vmatmul.mubr.bf16.gmra.mxu0 %v818
        %v857 = vpop.f32.mrf.mxu0
        %v858 = vadd.f32 %v697, %v857
        %v859 = vpop.f32.mrf.mxu0
        %v860 = vpop.f32.mrf.mxu0
        %v861 = vpop.f32.mrf.mxu0
        %862 = vdwg.mxu0
        %v863 = vsel %vm700, %v858, -inf
        %864 = vmax.xlane.f32.xlu0 %v863
        %v865 = vpop.xlane.xlu0 %864
        %v866 = vsub.f32 %v858, %v865
        %v867 = vmul.f32 %v866, 1.442695
        %v868 = vpow.pop %v867
        %v869 = vsel %vm700, %v868, 0.0
        %870 = vadd.xlane.f32.xlu0 %v869
        %v871 = vpop.xlane.xlu0 %870
        %v872 = vrcp.pop %v871
        %v873 = vmul.f32 %v868, %v872
        %v874 = vpack.c.bf16 %v873, %v873
        %v876 = vunpack.c.l.b16 %v808
        %v877 = vpack.c.b16 %v876, %v876
        %878 = vrot.lane.b32.xlu0 %v877, 120
        %v879 = vpop.permute.xlu0 %878
        %v881 = vsel %vm700, %v874, 0
        %v884 = vsel %vm762, %v879, 0
        %886 = vmatprep.subr.bf16.mxu0 0
        %887 = vmatpush1.bf16.msra.mxu0 0
        %888 = vmatprep.subr.bf16.mxu0 0
        %889 = vmatpush1.bf16.msra.mxu0 0
        %890 = vmatprep.subr.bf16.mxu0 0
        %891 = vmatpush1.bf16.msra.mxu0 0
        %892 = vmatprep.subr.bf16.mxu0 0
        %893 = vmatpush1.bf16.msra.mxu0 0
        %894 = vmatprep.subr.bf16.mxu0 0
        %895 = vmatpush1.bf16.msra.mxu0 0
        %896 = vmatprep.subr.bf16.mxu0 0
        %897 = vmatpush1.bf16.msra.mxu0 0
        %898 = vmatprep.subr.bf16.mxu0 0
        %899 = vmatpush1.bf16.msra.mxu0 0
        %900 = vmatprep.subr.bf16.mxu0 0
        %901 = vmatpush1.bf16.msra.mxu0 %v884
        %902 = vmatprep.subr.bf16.mxu0 0
        %903 = vmatpush2.bf16.msra.mxu0 0
        %904 = vmatprep.subr.bf16.mxu0 0
        %905 = vmatpush2.bf16.msra.mxu0 0
        %906 = vmatprep.subr.bf16.mxu0 0
        %907 = vmatpush2.bf16.msra.mxu0 0
        %908 = vmatprep.subr.bf16.mxu0 0
        %909 = vmatpush2.bf16.msra.mxu0 0
        %910 = vmatprep.subr.bf16.mxu0 0
        %911 = vmatpush2.bf16.msra.mxu0 0
        %912 = vmatprep.subr.bf16.mxu0 0
        %913 = vmatpush2.bf16.msra.mxu0 0
        %914 = vmatprep.subr.bf16.mxu0 0
        %915 = vmatpush2.bf16.msra.mxu0 0
        %916 = vmatprep.subr.bf16.mxu0 0
        %917 = vmatpush2.bf16.msra.mxu0 0
        %918 = vmatprep.mubr.bf16.mxu0 0
        %919 = vmatmul.mubr.bf16.gmra.mxu0 %v881
        %v920 = vpop.f32.mrf.mxu0
        %v921 = vadd.f32 0.0, %v920
        %v922 = vpop.f32.mrf.mxu0
        %v923 = vpop.f32.mrf.mxu0
        %v924 = vpop.f32.mrf.mxu0
        %925 = vdwg.mxu0
        %927 = vrot.lane.b32.xlu0 %v921, 8
        %v928 = vpop.permute.xlu0 %927
        %vm930 = vcmask 130112
        %931 = vst.msk [vmem:[#allocation4] sm:$0xff] %vm930, %v928
        %v932 = vld [vmem:[#allocation2] sm:$0xf]
        %v933 = vld [vmem:[#allocation3] sm:$0xf]
        %934 = vrot.lane.b32.xlu0 %v680, 112
        %v935 = vpop.permute.xlu0 %934
        %v937 = vunpack.c.l.b16 %v932
        %v938 = vpack.c.b16 %v937, %v937
        %939 = vrot.lane.b32.xlu0 %v938, 112
        %v940 = vpop.permute.xlu0 %939
        %v942 = vsel %vm700, %v935, 0
        %v945 = vsel %vm700, %v940, 0
        %947 = vmatprep.subr.bf16.mxu0 0
        %948 = vmatpush1.bf16.xpose.msra.mxu0 0
        %949 = vmatprep.subr.bf16.mxu0 0
        %950 = vmatpush1.bf16.xpose.msra.mxu0 0
        %951 = vmatprep.subr.bf16.mxu0 0
        %952 = vmatpush1.bf16.xpose.msra.mxu0 0
        %953 = vmatprep.subr.bf16.mxu0 0
        %954 = vmatpush1.bf16.xpose.msra.mxu0 0
        %955 = vmatprep.subr.bf16.mxu0 0
        %956 = vmatpush1.bf16.xpose.msra.mxu0 0
        %957 = vmatprep.subr.bf16.mxu0 0
        %958 = vmatpush1.bf16.xpose.msra.mxu0 0
        %959 = vmatprep.subr.bf16.mxu0 0
        %960 = vmatpush1.bf16.xpose.msra.mxu0 0
        %961 = vmatprep.subr.bf16.mxu0 0
        %962 = vmatpush1.bf16.xpose.msra.mxu0 %v945
        %963 = vmatprep.subr.bf16.mxu0 0
        %964 = vmatpush2.bf16.xpose.msra.mxu0 0
        %965 = vmatprep.subr.bf16.mxu0 0
        %966 = vmatpush2.bf16.xpose.msra.mxu0 0
        %967 = vmatprep.subr.bf16.mxu0 0
        %968 = vmatpush2.bf16.xpose.msra.mxu0 0
        %969 = vmatprep.subr.bf16.mxu0 0
        %970 = vmatpush2.bf16.xpose.msra.mxu0 0
        %971 = vmatprep.subr.bf16.mxu0 0
        %972 = vmatpush2.bf16.xpose.msra.mxu0 0
        %973 = vmatprep.subr.bf16.mxu0 0
        %974 = vmatpush2.bf16.xpose.msra.mxu0 0
        %975 = vmatprep.subr.bf16.mxu0 0
        %976 = vmatpush2.bf16.xpose.msra.mxu0 0
        %977 = vmatprep.subr.bf16.mxu0 0
        %978 = vmatpush2.bf16.xpose.msra.mxu0 0
        %979 = vmatprep.mubr.bf16.mxu0 0
        %980 = vmatmul.mubr.bf16.gmra.mxu0 %v942
        %v981 = vpop.f32.mrf.mxu0
        %v982 = vadd.f32 %v697, %v981
        %v983 = vpop.f32.mrf.mxu0
        %v984 = vpop.f32.mrf.mxu0
        %v985 = vpop.f32.mrf.mxu0
        %986 = vdwg.mxu0
        %v987 = vsel %vm700, %v982, -inf
        %988 = vmax.xlane.f32.xlu0 %v987
        %v989 = vpop.xlane.xlu0 %988
        %v990 = vsub.f32 %v982, %v989
        %v991 = vmul.f32 %v990, 1.442695
        %v992 = vpow.pop %v991
        %v993 = vsel %vm700, %v992, 0.0
        %994 = vadd.xlane.f32.xlu0 %v993
        %v995 = vpop.xlane.xlu0 %994
        %v996 = vrcp.pop %v995
        %v997 = vmul.f32 %v992, %v996
        %v998 = vpack.c.bf16 %v997, %v997
        %v1000 = vunpack.c.l.b16 %v933
        %v1001 = vpack.c.b16 %v1000, %v1000
        %1002 = vrot.lane.b32.xlu0 %v1001, 112
        %v1003 = vpop.permute.xlu0 %1002
        %v1005 = vsel %vm700, %v998, 0
        %v1008 = vsel %vm762, %v1003, 0
        %1010 = vmatprep.subr.bf16.mxu0 0
        %1011 = vmatpush1.bf16.msra.mxu0 0
        %1012 = vmatprep.subr.bf16.mxu0 0
        %1013 = vmatpush1.bf16.msra.mxu0 0
        %1014 = vmatprep.subr.bf16.mxu0 0
        %1015 = vmatpush1.bf16.msra.mxu0 0
        %1016 = vmatprep.subr.bf16.mxu0 0
        %1017 = vmatpush1.bf16.msra.mxu0 0
        %1018 = vmatprep.subr.bf16.mxu0 0
        %1019 = vmatpush1.bf16.msra.mxu0 0
        %1020 = vmatprep.subr.bf16.mxu0 0
        %1021 = vmatpush1.bf16.msra.mxu0 0
        %1022 = vmatprep.subr.bf16.mxu0 0
        %1023 = vmatpush1.bf16.msra.mxu0 0
        %1024 = vmatprep.subr.bf16.mxu0 0
        %1025 = vmatpush1.bf16.msra.mxu0 %v1008
        %1026 = vmatprep.subr.bf16.mxu0 0
        %1027 = vmatpush2.bf16.msra.mxu0 0
        %1028 = vmatprep.subr.bf16.mxu0 0
        %1029 = vmatpush2.bf16.msra.mxu0 0
        %1030 = vmatprep.subr.bf16.mxu0 0
        %1031 = vmatpush2.bf16.msra.mxu0 0
        %1032 = vmatprep.subr.bf16.mxu0 0
        %1033 = vmatpush2.bf16.msra.mxu0 0
        %1034 = vmatprep.subr.bf16.mxu0 0
        %1035 = vmatpush2.bf16.msra.mxu0 0
        %1036 = vmatprep.subr.bf16.mxu0 0
        %1037 = vmatpush2.bf16.msra.mxu0 0
        %1038 = vmatprep.subr.bf16.mxu0 0
        %1039 = vmatpush2.bf16.msra.mxu0 0
        %1040 = vmatprep.subr.bf16.mxu0 0
        %1041 = vmatpush2.bf16.msra.mxu0 0
        %1042 = vmatprep.mubr.bf16.mxu0 0
        %1043 = vmatmul.mubr.bf16.gmra.mxu0 %v1005
        %v1044 = vpop.f32.mrf.mxu0
        %v1045 = vadd.f32 0.0, %v1044
        %v1046 = vpop.f32.mrf.mxu0
        %v1047 = vpop.f32.mrf.mxu0
        %v1048 = vpop.f32.mrf.mxu0
        %1049 = vdwg.mxu0
        %1051 = vrot.lane.b32.xlu0 %v1045, 16
        %v1052 = vpop.permute.xlu0 %1051
        %vm1054 = vcmask 195712
        %1055 = vst.msk [vmem:[#allocation4] sm:$0xff] %vm1054, %v1052
        %v1056 = vld [vmem:[#allocation2] sm:$0xf]
        %v1057 = vld [vmem:[#allocation3] sm:$0xf]
        %1058 = vrot.lane.b32.xlu0 %v680, 104
        %v1059 = vpop.permute.xlu0 %1058
        %v1061 = vunpack.c.l.b16 %v1056
        %v1062 = vpack.c.b16 %v1061, %v1061
        %1063 = vrot.lane.b32.xlu0 %v1062, 104
        %v1064 = vpop.permute.xlu0 %1063
        %v1066 = vsel %vm700, %v1059, 0
        %v1069 = vsel %vm700, %v1064, 0
        %1071 = vmatprep.subr.bf16.mxu0 0
        %1072 = vmatpush1.bf16.xpose.msra.mxu0 0
        %1073 = vmatprep.subr.bf16.mxu0 0
        %1074 = vmatpush1.bf16.xpose.msra.mxu0 0
        %1075 = vmatprep.subr.bf16.mxu0 0
        %1076 = vmatpush1.bf16.xpose.msra.mxu0 0
        %1077 = vmatprep.subr.bf16.mxu0 0
        %1078 = vmatpush1.bf16.xpose.msra.mxu0 0
        %1079 = vmatprep.subr.bf16.mxu0 0
        %1080 = vmatpush1.bf16.xpose.msra.mxu0 0
        %1081 = vmatprep.subr.bf16.mxu0 0
        %1082 = vmatpush1.bf16.xpose.msra.mxu0 0
        %1083 = vmatprep.subr.bf16.mxu0 0
        %1084 = vmatpush1.bf16.xpose.msra.mxu0 0
        %1085 = vmatprep.subr.bf16.mxu0 0
        %1086 = vmatpush1.bf16.xpose.msra.mxu0 %v1069
        %1087 = vmatprep.subr.bf16.mxu0 0
        %1088 = vmatpush2.bf16.xpose.msra.mxu0 0
        %1089 = vmatprep.subr.bf16.mxu0 0
        %1090 = vmatpush2.bf16.xpose.msra.mxu0 0
        %1091 = vmatprep.subr.bf16.mxu0 0
        %1092 = vmatpush2.bf16.xpose.msra.mxu0 0
        %1093 = vmatprep.subr.bf16.mxu0 0
        %1094 = vmatpush2.bf16.xpose.msra.mxu0 0
        %1095 = vmatprep.subr.bf16.mxu0 0
        %1096 = vmatpush2.bf16.xpose.msra.mxu0 0
        %1097 = vmatprep.subr.bf16.mxu0 0
        %1098 = vmatpush2.bf16.xpose.msra.mxu0 0
        %1099 = vmatprep.subr.bf16.mxu0 0
        %1100 = vmatpush2.bf16.xpose.msra.mxu0 0
        %1101 = vmatprep.subr.bf16.mxu0 0
        %1102 = vmatpush2.bf16.xpose.msra.mxu0 0
        %1103 = vmatprep.mubr.bf16.mxu0 0
        %1104 = vmatmul.mubr.bf16.gmra.mxu0 %v1066
        %v1105 = vpop.f32.mrf.mxu0
        %v1106 = vadd.f32 %v697, %v1105
        %v1107 = vpop.f32.mrf.mxu0
        %v1108 = vpop.f32.mrf.mxu0
        %v1109 = vpop.f32.mrf.mxu0
        %1110 = vdwg.mxu0
        %v1111 = vsel %vm700, %v1106, -inf
        %1112 = vmax.xlane.f32.xlu0 %v1111
        %v1113 = vpop.xlane.xlu0 %1112
        %v1114 = vsub.f32 %v1106, %v1113
        %v1115 = vmul.f32 %v1114, 1.442695
        %v1116 = vpow.pop %v1115
        %v1117 = vsel %vm700, %v1116, 0.0
        %1118 = vadd.xlane.f32.xlu0 %v1117
        %v1119 = vpop.xlane.xlu0 %1118
        %v1120 = vrcp.pop %v1119
        %v1121 = vmul.f32 %v1116, %v1120
        %v1122 = vpack.c.bf16 %v1121, %v1121
        %v1124 = vunpack.c.l.b16 %v1057
        %v1125 = vpack.c.b16 %v1124, %v1124
        %1126 = vrot.lane.b32.xlu0 %v1125, 104
        %v1127 = vpop.permute.xlu0 %1126
        %v1129 = vsel %vm700, %v1122, 0
        %v1132 = vsel %vm762, %v1127, 0
        %1134 = vmatprep.subr.bf16.mxu0 0
        %1135 = vmatpush1.bf16.msra.mxu0 0
        %1136 = vmatprep.subr.bf16.mxu0 0
        %1137 = vmatpush1.bf16.msra.mxu0 0
        %1138 = vmatprep.subr.bf16.mxu0 0
        %1139 = vmatpush1.bf16.msra.mxu0 0
        %1140 = vmatprep.subr.bf16.mxu0 0
        %1141 = vmatpush1.bf16.msra.mxu0 0
        %1142 = vmatprep.subr.bf16.mxu0 0
        %1143 = vmatpush1.bf16.msra.mxu0 0
        %1144 = vmatprep.subr.bf16.mxu0 0
        %1145 = vmatpush1.bf16.msra.mxu0 0
        %1146 = vmatprep.subr.bf16.mxu0 0
        %1147 = vmatpush1.bf16.msra.mxu0 0
        %1148 = vmatprep.subr.bf16.mxu0 0
        %1149 = vmatpush1.bf16.msra.mxu0 %v1132
        %1150 = vmatprep.subr.bf16.mxu0 0
        %1151 = vmatpush2.bf16.msra.mxu0 0
        %1152 = vmatprep.subr.bf16.mxu0 0
        %1153 = vmatpush2.bf16.msra.mxu0 0
        %1154 = vmatprep.subr.bf16.mxu0 0
        %1155 = vmatpush2.bf16.msra.mxu0 0
        %1156 = vmatprep.subr.bf16.mxu0 0
        %1157 = vmatpush2.bf16.msra.mxu0 0
        %1158 = vmatprep.subr.bf16.mxu0 0
        %1159 = vmatpush2.bf16.msra.mxu0 0
        %1160 = vmatprep.subr.bf16.mxu0 0
        %1161 = vmatpush2.bf16.msra.mxu0 0
        %1162 = vmatprep.subr.bf16.mxu0 0
        %1163 = vmatpush2.bf16.msra.mxu0 0
        %1164 = vmatprep.subr.bf16.mxu0 0
        %1165 = vmatpush2.bf16.msra.mxu0 0
        %1166 = vmatprep.mubr.bf16.mxu0 0
        %1167 = vmatmul.mubr.bf16.gmra.mxu0 %v1129
        %v1168 = vpop.f32.mrf.mxu0
        %v1169 = vadd.f32 0.0, %v1168
        %v1170 = vpop.f32.mrf.mxu0
        %v1171 = vpop.f32.mrf.mxu0
        %v1172 = vpop.f32.mrf.mxu0
        %1173 = vdwg.mxu0
        %1175 = vrot.lane.b32.xlu0 %v1169, 24
        %v1176 = vpop.permute.xlu0 %1175
        %vm1178 = vcmask 261312
        %1179 = vst.msk [vmem:[#allocation4] sm:$0xff] %vm1178, %v1176
        %v1180 = vld [vmem:[#allocation4] sm:$0xff]
        %v1181 = vadd.f32 %v610, %v1180
        %v1182 = vsel %vm635, %v1181, 0.0
        %1183 = vadd.xlane.f32.xlu0 %v1182
        %v1184 = vpop.xlane.xlu0 %1183
        %v1185 = vrcp.pop 32.0
        %v1186 = vmul.f32 %v1184, %v1185
        %v1187 = vsub.f32 %v1181, %v1186
        %v1188 = vmul.f32 %v1187, %v1187
        %v1189 = vsel %vm635, %v1188, 0.0
        %1190 = vadd.xlane.f32.xlu0 %v1189
        %v1191 = vpop.xlane.xlu0 %1190
        %v1192 = vmul.f32 %v1191, %v1185
        %v1193 = vadd.f32 %v1192, 1e-05
        %v1194 = vrsqrt.pop %v1193
        %v1195 = vmul.f32 %v1187, %v1194
        %v1196 = vld [vmem:[%s8] sm:$0x1]
        %v1198 = vlaneseq
        %v1199 = vshrl.u32 %v1198, 7
        %v1200 = vsub.s32 0, %v1199
        %v1201 = vrot.slane %v1196, %v1200
        %v1203 = vmul.f32 %v1195, %v1201
        %v1204 = vld [vmem:[%s9] sm:$0x1]
        %v1206 = vlaneseq
        %v1207 = vshrl.u32 %v1206, 7
        %v1208 = vsub.s32 0, %v1207
        %v1209 = vrot.slane %v1204, %v1208
        %v1211 = vadd.f32 %v1203, %v1209
        %1212 = vst.msk [vmem:[%s465] sm:$0xff] %vm635, %v1211
        %s1213 = sand.u32 %s273, 1
        %s1214 = scalar_lea.sflag [#allocation7], %s1213
        %s1215 = sand.u32 %s273, 1
        %s1216 = smul.addr %s1215, 8
        %s1217 = scalar_lea.vmem [#allocation14], %s1216
        // Predicated region
        $region85: #{tpu_custom_call.1} parent=59 // pred_check
          %p1218 = pneg %p283
        $region86: #{tpu_custom_call.1} parent=59 // pred_check_branch
          %1220 = sbr.rel (%p1218) target = $region88
        $region87: #{tpu_custom_call.1} parent=59 // pred_region
          %s1222 = ssub.s32 128, 128
          %1223 = vsyncadd %s1214, %s1222
          %s1224 = sadd.s32 %s36, %s35
          %s1225 = smul.addr %s1224, 128
          %s1226 = scalar_lea.hbm %s10, %s1225
          %s1228 = sshll.u32 %s1217, 4
          %s1229 = int_to_ptr.vmem [resolvable:$true] %s1228
          %1231 = dma.vmem_to_hbm [thread:$0]  %s1229, 128, %s1226, %s1214
        $region88: #{tpu_custom_call.1} parent=59 // pred_fallthru
          _
      $region60: #{tpu_custom_call.1} parent=5 // pred_fallthru
        _
      %p1232 = scmp.le.s32.totalorder 2, %s26
      // Predicated region
      $region89: #{tpu_custom_call.1} parent=5 // pred_check
        %p1233 = pneg %p1232
      $region90: #{tpu_custom_call.1} parent=5 // pred_check_branch
        %1235 = sbr.rel (%p1233) target = $region92
      $region91: #{tpu_custom_call.1} parent=5 // pred_region
        %s1236 = ssub.s32 %s26, 2
        // Predicated region
        $region93: #{tpu_custom_call.1} parent=91 // pred_check
          %p1237 = pneg %p289
        $region94: #{tpu_custom_call.1} parent=91 // pred_check_branch
          %1239 = sbr.rel (%p1237) target = $region96
        $region95: #{tpu_custom_call.1} parent=91 // pred_region
          %s1240 = sand.u32 %s274, 1
          %s1241 = scalar_lea.sflag [#allocation7], %s1240
          %s1242 = sand.u32 %s274, 1
          %s1243 = smul.addr %s1242, 8
          %s1244 = scalar_lea.vmem [#allocation14], %s1243
          %1245 = dma.done %s1241, 128
        $region96: #{tpu_custom_call.1} parent=91 // pred_fallthru
          _
      $region92: #{tpu_custom_call.1} parent=5 // pred_fallthru
        _
    $region6: #{tpu_custom_call.1} parent=1 // loop_footer
      %s30 = sadd.s32 1, %s26
    $region7: #{tpu_custom_call.1} parent=1 // loop_footer_branch
      %25 = sbr.rel target = $region3
    $region8: #{tpu_custom_call.1} parent=1 // loop_exit
      _
    %1246 = vsyncpa [#allocation6], 1
    %s1247 = scalar_lea.sflag [#allocation6], 1
    %1248 = vsyncpa %s1247, 1
    %1249 = vsyncpa [#allocation9], 1
    %s1250 = scalar_lea.sflag [#allocation9], 1
    %1251 = vsyncpa %s1250, 1
    %1252 = vsyncpa [#allocation12], 1
    %1253 = vsyncpa [#allocation7], 1
    %s1254 = scalar_lea.sflag [#allocation7], 1
    %1255 = vsyncpa %s1254, 1

</llo_original>
